<compile_context>
chip_gen: v5e
topology: v5e:2x2
jax: 0.10.0
libtpu: 0.0.40
codegen_flags: <defaults>
</compile_context>

<pallas_src>
import numpy as np
import jax
import jax.numpy as jnp
from jax import lax
from jax.experimental import pallas as pl
from jax.experimental.pallas import tpu as pltpu

# Reduced, kernel-friendly hyper-params (module defaults are n_fft=512, hop=128;
# the kernel structure is identical for the full-size configuration).
N_FFT = 64
HOP = 16
RATIO = N_FFT // HOP              # frame overlap factor (4)
N_FREQ = N_FFT // 2 + 1           # onesided rFFT bins (33)
F_PAD = 128                       # lane-dense padded frequency width
MIN_LEVEL_DB = -100.0
REF_LEVEL_DB = 25.0
TILE_T = 256                      # frames per grid step (MXU-sized M)

_LN10 = float(np.log(10.0))


def _process_audio_kernel(frames_ref, w_ref, o_ref):
    """(TILE_T, N_FFT) frames -> (TILE_T, 3*F_PAD) = [norm dB | sin(ph) | cos(ph)]."""
    fr = frames_ref[...]                                            # (TILE_T, N_FFT)
    # Fused rFFT: one MXU matmul against the [cos | -sin] basis (zero-padded lanes).
    proj = jnp.dot(fr, w_ref[...],
                   preferred_element_type=jnp.float32)              # (TILE_T, 2*F_PAD)
    re = proj[:, :F_PAD]
    im = proj[:, F_PAD:]

    mag2 = re * re + im * im
    # amp_to_db(|z|) = 20*log10(max(|z|, 1e-7)) - ref == 10*log10(max(|z|^2, 1e-14)) - ref
    db = (10.0 / _LN10) * jnp.log(jnp.maximum(mag2, jnp.float32(1e-14))) - REF_LEVEL_DB
    nrm = jnp.clip((db - MIN_LEVEL_DB) / (-MIN_LEVEL_DB) * 2.0 - 1.0, -1.0, 1.0)

    # unwrap() is an identity for this input rank -> phase = atan2(im, re).
    # sin = im/|z|, cos = re/|z| via EUP rsqrt + one Newton step (f32-accurate,
    # no divides); atan2(0,0)=0 convention -> (sin, cos) = (0, 1).
    m2c = jnp.maximum(mag2, jnp.float32(1e-30))
    inv = lax.rsqrt(m2c)
    inv = inv * (1.5 - 0.5 * m2c * inv * inv)
    sinp = im * inv
    cosp = jnp.where(mag2 > 0.0, re * inv, jnp.float32(1.0))

    # Lane-aligned (128-boundary) full-vreg stores into one contiguous slab.
    o_ref[:, 0 * F_PAD:1 * F_PAD] = nrm
    o_ref[:, 1 * F_PAD:2 * F_PAD] = sinp
    o_ref[:, 2 * F_PAD:3 * F_PAD] = cosp


def _dft_basis():
    """Fused onesided-DFT basis: columns [0:33]=cos, [128:161]=-sin, rest zero."""
    n = np.arange(N_FFT)[:, None].astype(np.float64)
    f = np.arange(N_FREQ)[None, :].astype(np.float64)
    ang = 2.0 * np.pi * n * f / N_FFT
    w = np.zeros((N_FFT, 2 * F_PAD), dtype=np.float32)
    w[:, :N_FREQ] = np.cos(ang)
    w[:, F_PAD:F_PAD + N_FREQ] = -np.sin(ang)
    return jnp.asarray(w)


def process_audio_forward(audio):
    """audio: (1, 1, time) float32 -> features (T, 3, N_FREQ) float32."""
    sig = audio.reshape(-1).astype(jnp.float32)
    time = sig.shape[0]

    # torch.stft center=True -> reflect-pad n_fft//2 on both sides.
    pad = N_FFT // 2
    padded = jnp.pad(sig, (pad, pad), mode="reflect")
    n_frames = time // HOP + 1

    # Framing: frame t = concat_k chunk[t+k], chunk[j] = padded[j*HOP:(j+1)*HOP].
    # Shifted slices + lane concat (no gather); bitwise identical to torch framing.
    needed = (n_frames - 1) * HOP + N_FFT
    chunks = padded[:needed].reshape(n_frames + RATIO - 1, HOP)
    frames = jnp.concatenate([chunks[k:k + n_frames] for k in range(RATIO)], axis=1)

    # Pad frame count up to the tile size (extra rows sliced off afterwards).
    t_pad = pl.cdiv(n_frames, TILE_T) * TILE_T
    frames_p = jnp.pad(frames, ((0, t_pad - n_frames), (0, 0)))

    w = _dft_basis()

    out = pl.pallas_call(
        _process_audio_kernel,
        out_shape=jax.ShapeDtypeStruct((t_pad, 3 * F_PAD), jnp.float32),
        grid_spec=pltpu.PrefetchScalarGridSpec(
            num_scalar_prefetch=0,
            grid=(t_pad // TILE_T,),
            in_specs=[
                pl.BlockSpec((TILE_T, N_FFT), lambda i: (i, 0)),
                pl.BlockSpec((N_FFT, 2 * F_PAD), lambda i: (0, 0)),  # VMEM-resident
            ],
            out_specs=pl.BlockSpec((TILE_T, 3 * F_PAD), lambda i: (i, 0)),
        ),
        compiler_params=pltpu.CompilerParams(
            dimension_semantics=("parallel",)),
    )(frames_p, w)

    # (T, 3*128) -> (T, 3, 128) (free reshape) -> slice the 33 real bins.
    features = out[:n_frames].reshape(n_frames, 3, F_PAD)[:, :, :N_FREQ]
    return features


def _process_audio_reference(audio):
    """Pure-JAX reference (same math, no Pallas) for a sanity check."""
    sig = audio.reshape(-1).astype(jnp.float32)
    time = sig.shape[0]
    pad = N_FFT // 2
    padded = jnp.pad(sig, (pad, pad), mode="reflect")
    n_frames = time // HOP + 1
    idx = (jnp.arange(n_frames) * HOP)[:, None] + jnp.arange(N_FFT)[None, :]
    frames = padded[idx]
    n = np.arange(N_FFT)[:, None].astype(np.float64)
    f = np.arange(N_FREQ)[None, :].astype(np.float64)
    ang = 2.0 * np.pi * n * f / N_FFT
    wr = jnp.asarray(np.cos(ang), dtype=jnp.float32)
    wi = jnp.asarray(-np.sin(ang), dtype=jnp.float32)
    re = jnp.dot(frames, wr, precision=lax.Precision.HIGHEST)
    im = jnp.dot(frames, wi, precision=lax.Precision.HIGHEST)
    mag = jnp.sqrt(re * re + im * im)
    db = 20.0 * jnp.log10(jnp.maximum(mag, 1e-7)) - REF_LEVEL_DB
    nrm = jnp.clip((db - MIN_LEVEL_DB) / (-MIN_LEVEL_DB) * 2.0 - 1.0, -1.0, 1.0)
    phase = jnp.arctan2(im, re)
    return jnp.stack([nrm, jnp.sin(phase), jnp.cos(phase)], axis=1)


if __name__ == "__main__":
    key = jax.random.PRNGKey(0)
    time = 8000                                  # 501 frames (module default ~96000)
    audio = jax.random.normal(key, (1, 1, time), dtype=jnp.float32)

    feats = jax.block_until_ready(process_audio_forward(audio))
    ref = jax.block_until_ready(_process_audio_reference(audio))

    assert feats.shape == (time // HOP + 1, 3, N_FREQ), feats.shape
    # atol is 1e-3 because sin/cos of near-zero-magnitude bins are ill-conditioned
    # w.r.t. f32 matmul rounding (kernel MXU vs XLA dot); typical diffs are ~1e-6.
    np.testing.assert_allclose(np.asarray(feats), np.asarray(ref),
                               rtol=1e-4, atol=1e-3)
    print("KERNEL_OK")
</pallas_src>

<mosaic_0001>
module attributes {stable_mosaic.version = 11 : i64} {
  func.func @_process_audio_kernel(%arg0: i32, %arg1: memref<256x64xf32, #tpu.memory_space<vmem>>, %arg2: memref<64x256xf32, #tpu.memory_space<vmem>>, %arg3: memref<256x384xf32, #tpu.memory_space<vmem>>) attributes {dimension_semantics = [#tpu.dimension_semantics<parallel>], iteration_bounds = array<i64: 2>, scalar_prefetch = 0 : i64, scratch_operands = 0 : i64, tpu.core_type = #tpu.core_type<tc>, window_params = [{transform_indices = @transform_0, window_bounds = array<i64: 256, 64>}, {pipeline_mode = #tpu.pipeline_mode<synchronous>, transform_indices = @transform_1, window_bounds = array<i64: 64, 256>}, {transform_indices = @transform_2, window_bounds = array<i64: 256, 384>}]} {
    %c0 = arith.constant 0 : index
    %c0_0 = arith.constant 0 : index
    %0 = vector.load %arg1[%c0, %c0_0] : memref<256x64xf32, #tpu.memory_space<vmem>>, vector<256x64xf32>
    %c0_1 = arith.constant 0 : index
    %c0_2 = arith.constant 0 : index
    %1 = vector.load %arg2[%c0_1, %c0_2] : memref<64x256xf32, #tpu.memory_space<vmem>>, vector<64x256xf32>
    %cst = arith.constant dense<0.000000e+00> : vector<256x256xf32>
    %2 = tpu.matmul %0, %1, %cst {dimension_numbers = #tpu.dot_dimension_numbers<[1], [0], [0], [1], [0, 0, 1, 1], [], []>} : vector<256x64xf32>, vector<64x256xf32>, vector<256x256xf32> -> vector<256x256xf32>
    %3 = vector.extract_strided_slice %2 {offsets = [0, 0], sizes = [256, 128], strides = [1, 1]} : vector<256x256xf32> to vector<256x128xf32>
    %4 = vector.extract_strided_slice %2 {offsets = [0, 128], sizes = [256, 128], strides = [1, 1]} : vector<256x256xf32> to vector<256x128xf32>
    %5 = arith.mulf %3, %3 : vector<256x128xf32>
    %6 = arith.mulf %4, %4 : vector<256x128xf32>
    %7 = arith.addf %5, %6 : vector<256x128xf32>
    %cst_3 = arith.constant 9.99999982E-15 : f32
    %8 = vector.broadcast %cst_3 : f32 to vector<256x128xf32>
    %9 = arith.maximumf %7, %8 : vector<256x128xf32>
    %10 = math.log %9 : vector<256x128xf32>
    %cst_4 = arith.constant 4.34294462 : f32
    %11 = vector.broadcast %cst_4 : f32 to vector<256x128xf32>
    %12 = arith.mulf %11, %10 : vector<256x128xf32>
    %cst_5 = arith.constant 2.500000e+01 : f32
    %13 = vector.broadcast %cst_5 : f32 to vector<256x128xf32>
    %14 = arith.subf %12, %13 : vector<256x128xf32>
    %cst_6 = arith.constant -1.000000e+02 : f32
    %15 = vector.broadcast %cst_6 : f32 to vector<256x128xf32>
    %16 = arith.subf %14, %15 : vector<256x128xf32>
    %cst_7 = arith.constant 1.000000e+02 : f32
    %17 = vector.broadcast %cst_7 : f32 to vector<256x128xf32>
    %18 = arith.divf %16, %17 : vector<256x128xf32>
    %cst_8 = arith.constant 2.000000e+00 : f32
    %19 = vector.broadcast %cst_8 : f32 to vector<256x128xf32>
    %20 = arith.mulf %18, %19 : vector<256x128xf32>
    %cst_9 = arith.constant 1.000000e+00 : f32
    %21 = vector.broadcast %cst_9 : f32 to vector<256x128xf32>
    %22 = arith.subf %20, %21 : vector<256x128xf32>
    %cst_10 = arith.constant -1.000000e+00 : f32
    %cst_11 = arith.constant 1.000000e+00 : f32
    %23 = vector.broadcast %cst_10 : f32 to vector<256x128xf32>
    %24 = arith.maximumf %23, %22 : vector<256x128xf32>
    %25 = vector.broadcast %cst_11 : f32 to vector<256x128xf32>
    %26 = arith.minimumf %25, %24 : vector<256x128xf32>
    %cst_12 = arith.constant 1.000000e-30 : f32
    %27 = vector.broadcast %cst_12 : f32 to vector<256x128xf32>
    %28 = arith.maximumf %7, %27 : vector<256x128xf32>
    %29 = math.rsqrt %28 : vector<256x128xf32>
    %cst_13 = arith.constant 5.000000e-01 : f32
    %30 = vector.broadcast %cst_13 : f32 to vector<256x128xf32>
    %31 = arith.mulf %30, %28 : vector<256x128xf32>
    %32 = arith.mulf %31, %29 : vector<256x128xf32>
    %33 = arith.mulf %32, %29 : vector<256x128xf32>
    %cst_14 = arith.constant 1.500000e+00 : f32
    %34 = vector.broadcast %cst_14 : f32 to vector<256x128xf32>
    %35 = arith.subf %34, %33 : vector<256x128xf32>
    %36 = arith.mulf %29, %35 : vector<256x128xf32>
    %37 = arith.mulf %4, %36 : vector<256x128xf32>
    %cst_15 = arith.constant 0.000000e+00 : f32
    %38 = vector.broadcast %cst_15 : f32 to vector<256x128xf32>
    %39 = arith.cmpf ogt, %7, %38 : vector<256x128xf32>
    %40 = arith.mulf %3, %36 : vector<256x128xf32>
    %cst_16 = arith.constant 1.000000e+00 : f32
    %41 = vector.broadcast %cst_16 : f32 to vector<256x128xf32>
    %42 = arith.select %39, %40, %41 : vector<256x128xi1>, vector<256x128xf32>
    %c0_17 = arith.constant 0 : index
    %c0_18 = arith.constant 0 : index
    %43 = vector.load %arg3[%c0_17, %c0_18] : memref<256x384xf32, #tpu.memory_space<vmem>>, vector<256x128xf32>
    tpu.vector_store %arg3[%c0_17, %c0_18], %26 {strides = array<i32>} : memref<256x384xf32, #tpu.memory_space<vmem>>, vector<256x128xf32>,
    %c0_19 = arith.constant 0 : index
    %c128 = arith.constant 128 : index
    %44 = vector.load %arg3[%c0_19, %c128] : memref<256x384xf32, #tpu.memory_space<vmem>>, vector<256x128xf32>
    tpu.vector_store %arg3[%c0_19, %c128], %37 {strides = array<i32>} : memref<256x384xf32, #tpu.memory_space<vmem>>, vector<256x128xf32>,
    %c0_20 = arith.constant 0 : index
    %c256 = arith.constant 256 : index
    %45 = vector.load %arg3[%c0_20, %c256] : memref<256x384xf32, #tpu.memory_space<vmem>>, vector<256x128xf32>
    tpu.vector_store %arg3[%c0_20, %c256], %42 {strides = array<i32>} : memref<256x384xf32, #tpu.memory_space<vmem>>, vector<256x128xf32>,
    return
  }
  func.func @transform_0(%arg0: i32) -> (i32, i32) {
    %c0_i32 = arith.constant 0 : i32
    %c0_i32_0 = arith.constant 0 : i32
    return %arg0, %c0_i32 : i32, i32
  }
  func.func @transform_1(%arg0: i32) -> (i32, i32) {
    %c0_i32 = arith.constant 0 : i32
    %c0_i32_0 = arith.constant 0 : i32
    %c0_i32_1 = arith.constant 0 : i32
    return %c0_i32, %c0_i32_0 : i32, i32
  }
  func.func @transform_2(%arg0: i32) -> (i32, i32) {
    %c0_i32 = arith.constant 0 : i32
    %c0_i32_0 = arith.constant 0 : i32
    return %arg0, %c0_i32 : i32, i32
  }
}

</mosaic_0001>

<llo_original>
// kernel: tpu_custom_call.1
$region0: #{tpu_custom_call.1}
  #allocation0 [shape = 'u32[]', space=smem, size = 0x4, offset = 0x4, fixed_abs, tag = 'smem constant byte address 0x4 - core index']
  #allocation1 [shape = 'u32[72,128]{1,0:T(1,128)}', space=vmem, size = 0x9000, scoped, tag = 'internal scratch']
  %s0 = inlined_call_operand.vmem [shape: f32[512,64], index: 0, kind: input, shape index: {}]
  %s1 = inlined_call_operand.vmem [shape: f32[64,256], index: 1, kind: input, shape index: {}]
  %s2 = inlined_call_operand.hbm [shape: f32[512,384], index: 2, kind: output, shape index: {}]
  %s3 = sld [smem:[#allocation0]]
  $region41: #{tpu_custom_call.1} parent=0
    _
  %s5 = ssub.s32 1, %s3
  %s6 = scalar_select 0, %s5, %s3
  $region1: #{tpu_custom_call.1} parent=0
    #allocation2 [shape = 'u8[786432]{0}', space=vmem, size = 0xc0000, scoped, tag = 'output window, operand 0']
    #allocation3 [shape = 's32[2]{0}', space=sflag, size = 0x8, scoped, tag = 'scoped memory for tpu_custom_call.1']
    %7 = vsyncpa [#allocation3], 0
    %s8 = scalar_lea.sflag [#allocation3], 1
    %9 = vsyncpa %s8, 0
    loop: start=0, step=1, limit=4
    $region2: #{tpu_custom_call.1} parent=1 // loop_pre_header
      _
    $region3: #{tpu_custom_call.1} parent=1 // loop_header
      %s11 = sphi 0, %s15
      %p12 = scmp.ge.s32.totalorder %s11, 4
      %s21 = sphi 0, %s23
      %s24 = sphi 0, %s21
      %s25 = sphi 0, %s24
      %s41 = sphi 0, %s25
      %s45 = sphi 0, %s45
      %s47 = sphi 0, %s45
      %s48 = sphi 0, %s47
      %s62 = sphi 0, %s48
      %s68 = sphi 0, %s70
      %s71 = sphi 0, %s68
      %s72 = sphi 0, %s71
      %s88 = sphi 0, %s72
    $region4: #{tpu_custom_call.1} parent=1 // loop_header_branch
      %14 = sbr.rel (%p12) target = $region8
    $region5: #{tpu_custom_call.1} parent=1 // loop_body
      %s16 = ssub.s32 %s11, 1
      %s17 = ssub.s32 %s11, 2
      %s18 = sadd.s32 %s11, 1
      %s19 = ssub.s32 %s11, %s18
      %p20 = scmp.eq.s32.totalorder %s19, 0
      %s22 = sadd.s32 %s21, 1
      %s23 = scalar_select %p20, %s21, %s22
      %p26 = pneg %p20
      %p27 = scmp.eq.s32.totalorder %s11, 1
      %p28 = por %p26, %p27
      %p29 = scmp.ne.s32.totalorder %s21, %s24
      %p30 = scmp.eq.s32.totalorder %s11, 0
      %p31 = por %p29, %p30
      %p32 = scmp.ne.s32.totalorder %s21, %s24
      %p33 = scmp.eq.s32.totalorder %s16, 1
      %p34 = por %p32, %p33
      %p35 = scmp.ne.s32.totalorder %s24, %s25
      %p36 = scmp.eq.s32.totalorder %s16, 0
      %p37 = por %p35, %p36
      %p38 = scmp.ne.s32.totalorder %s24, %s25
      %p39 = scmp.eq.s32.totalorder %s17, 1
      %p40 = por %p38, %p39
      %p42 = scmp.ne.s32.totalorder %s25, %s41
      %p43 = scmp.eq.s32.totalorder %s17, 0
      %p44 = por %p42, %p43
      %s46 = sadd.s32 %s45, 1
      %p49 = scmp.eq.s32.totalorder %s11, 1
      %p50 = scmp.ne.s32.totalorder %s45, %s47
      %p51 = scmp.eq.s32.totalorder %s11, 0
      %p52 = por %p50, %p51
      %p53 = scmp.ne.s32.totalorder %s45, %s47
      %p54 = scmp.eq.s32.totalorder %s16, 1
      %p55 = por %p53, %p54
      %p56 = scmp.ne.s32.totalorder %s47, %s48
      %p57 = scmp.eq.s32.totalorder %s16, 0
      %p58 = por %p56, %p57
      %p59 = scmp.ne.s32.totalorder %s47, %s48
      %p60 = scmp.eq.s32.totalorder %s17, 1
      %p61 = por %p59, %p60
      %p63 = scmp.ne.s32.totalorder %s48, %s62
      %p64 = scmp.eq.s32.totalorder %s17, 0
      %p65 = por %p63, %p64
      %s66 = ssub.s32 %s11, %s18
      %p67 = scmp.eq.s32.totalorder %s66, 0
      %s69 = sadd.s32 %s68, 1
      %s70 = scalar_select %p67, %s68, %s69
      %p73 = pneg %p67
      %p74 = scmp.eq.s32.totalorder %s11, 1
      %p75 = por %p73, %p74
      %p76 = scmp.ne.s32.totalorder %s68, %s71
      %p77 = scmp.eq.s32.totalorder %s11, 0
      %p78 = por %p76, %p77
      %p79 = scmp.ne.s32.totalorder %s68, %s71
      %p80 = scmp.eq.s32.totalorder %s16, 1
      %p81 = por %p79, %p80
      %p82 = scmp.ne.s32.totalorder %s71, %s72
      %p83 = scmp.eq.s32.totalorder %s16, 0
      %p84 = por %p82, %p83
      %p85 = scmp.ne.s32.totalorder %s71, %s72
      %p86 = scmp.eq.s32.totalorder %s17, 1
      %p87 = por %p85, %p86
      %p89 = scmp.ne.s32.totalorder %s72, %s88
      %p90 = scmp.eq.s32.totalorder %s17, 0
      %p91 = por %p89, %p90
      %p92 = scmp.le.s32.totalorder 1, %s11
      %p93 = scmp.lt.s32.totalorder %s11, 3
      %p94 = pnand %p92, %p93
      %p95 = pneg %p94
      // Predicated region
      $region9: #{tpu_custom_call.1} parent=5 // pred_check
        _
      $region10: #{tpu_custom_call.1} parent=5 // pred_check_branch
        %97 = sbr.rel (%p94) target = $region12
      $region11: #{tpu_custom_call.1} parent=5 // pred_region
        %s98 = ssub.s32 %s11, 1
        // Predicated region
        $region13: #{tpu_custom_call.1} parent=11 // pred_check
          %p99 = pneg %p58
        $region14: #{tpu_custom_call.1} parent=11 // pred_check_branch
          %101 = sbr.rel (%p99) target = $region16
        $region15: #{tpu_custom_call.1} parent=11 // pred_region
          _
        $region16: #{tpu_custom_call.1} parent=11 // pred_fallthru
          _
      $region12: #{tpu_custom_call.1} parent=5 // pred_fallthru
        _
      %p102 = scmp.lt.s32.totalorder %s11, 2
      // Predicated region
      $region17: #{tpu_custom_call.1} parent=5 // pred_check
        %p103 = pneg %p102
      $region18: #{tpu_custom_call.1} parent=5 // pred_check_branch
        %105 = sbr.rel (%p103) target = $region20
      $region19: #{tpu_custom_call.1} parent=5 // pred_region
        // Predicated region
        $region21: #{tpu_custom_call.1} parent=19 // pred_check
          %p106 = pneg %p31
        $region22: #{tpu_custom_call.1} parent=19 // pred_check_branch
          %108 = sbr.rel (%p106) target = $region24
        $region23: #{tpu_custom_call.1} parent=19 // pred_region
          %s109 = smul.u32 32, %s11
          %p110 = scmp.lt.s32.totalorder %s109, 63
          %s111 = scalar_select %p110, %s109, 63
          %s112 = smul.addr %s111, 8
          %s113 = scalar_lea.vmem %s0, %s112
          %s114 = smul.u32 32, %s11
        $region24: #{tpu_custom_call.1} parent=19 // pred_fallthru
          _
      $region20: #{tpu_custom_call.1} parent=5 // pred_fallthru
        _
      %p115 = scmp.le.s32.totalorder 1, %s11
      %p116 = scmp.lt.s32.totalorder %s11, 3
      %p117 = pnand %p115, %p116
      %p118 = pneg %p117
      // Predicated region
      $region25: #{tpu_custom_call.1} parent=5 // pred_check
        _
      $region26: #{tpu_custom_call.1} parent=5 // pred_check_branch
        %120 = sbr.rel (%p117) target = $region28
      $region27: #{tpu_custom_call.1} parent=5 // pred_region
        %s121 = ssub.s32 %s11, 1
        %s122 = smul.u32 32, %s16
        %p123 = scmp.lt.s32.totalorder %s122, 63
        %s124 = scalar_select %p123, %s122, 63
        %s125 = smul.addr %s124, 8
        %s126 = scalar_lea.vmem %s0, %s125
        %p127 = pneg %p37
        %p128 = pneg %p34
        %p129 = pneg %p58
        %p130 = pneg %p55
        %p131 = pneg %p84
        %p132 = pneg %p81
        %s133 = sand.u32 %s71, 1
        %s134 = scalar_lea.sflag [#allocation3], %s133
        %s135 = sand.u32 %s71, 1
        %s136 = smul.addr %s135, 768
        %s137 = scalar_lea.vmem [#allocation2], %s136
        %s138 = smul.u32 32, %s16
        %p139 = scmp.lt.s32.totalorder %s138, 63
        %s140 = scalar_select %p139, %s138, 63
        %s141 = smul.addr %s140, 8
        %s142 = scalar_lea.vmem %s0, %s141
        %s143 = smul.u32 32, %s16
        %s144 = smul.u32 32, %s16
        %v145 = vld [vmem:[%s142] sm:$0xff]
        %v146 = vld [vmem:[%s142 + $0x8] sm:$0xff]
        %v147 = vld [vmem:[%s142 + $0x10] sm:$0xff]
        %v148 = vld [vmem:[%s142 + $0x18] sm:$0xff]
        %v149 = vld [vmem:[%s142 + $0x20] sm:$0xff]
        %v150 = vld [vmem:[%s142 + $0x28] sm:$0xff]
        %v151 = vld [vmem:[%s142 + $0x30] sm:$0xff]
        %v152 = vld [vmem:[%s142 + $0x38] sm:$0xff]
        %v153 = vld [vmem:[%s142 + $0x40] sm:$0xff]
        %v154 = vld [vmem:[%s142 + $0x48] sm:$0xff]
        %v155 = vld [vmem:[%s142 + $0x50] sm:$0xff]
        %v156 = vld [vmem:[%s142 + $0x58] sm:$0xff]
        %v157 = vld [vmem:[%s142 + $0x60] sm:$0xff]
        %v158 = vld [vmem:[%s142 + $0x68] sm:$0xff]
        %v159 = vld [vmem:[%s142 + $0x70] sm:$0xff]
        %v160 = vld [vmem:[%s142 + $0x78] sm:$0xff]
        %v161 = vld [vmem:[%s142 + $0x80] sm:$0xff]
        %v162 = vld [vmem:[%s142 + $0x88] sm:$0xff]
        %v163 = vld [vmem:[%s142 + $0x90] sm:$0xff]
        %v164 = vld [vmem:[%s142 + $0x98] sm:$0xff]
        %v165 = vld [vmem:[%s142 + $0xa0] sm:$0xff]
        %v166 = vld [vmem:[%s142 + $0xa8] sm:$0xff]
        %v167 = vld [vmem:[%s142 + $0xb0] sm:$0xff]
        %v168 = vld [vmem:[%s142 + $0xb8] sm:$0xff]
        %v169 = vld [vmem:[%s142 + $0xc0] sm:$0xff]
        %v170 = vld [vmem:[%s142 + $0xc8] sm:$0xff]
        %v171 = vld [vmem:[%s142 + $0xd0] sm:$0xff]
        %v172 = vld [vmem:[%s142 + $0xd8] sm:$0xff]
        %v173 = vld [vmem:[%s142 + $0xe0] sm:$0xff]
        %v174 = vld [vmem:[%s142 + $0xe8] sm:$0xff]
        %v175 = vld [vmem:[%s142 + $0xf0] sm:$0xff]
        %v176 = vld [vmem:[%s142 + $0xf8] sm:$0xff]
        %v177 = vld [vmem:[%s1] sm:$0xff]
        %v178 = vld [vmem:[%s1 + $0x8] sm:$0xff]
        %v179 = vld [vmem:[%s1 + $0x10] sm:$0xff]
        %v180 = vld [vmem:[%s1 + $0x18] sm:$0xff]
        %v181 = vld [vmem:[%s1 + $0x20] sm:$0xff]
        %v182 = vld [vmem:[%s1 + $0x28] sm:$0xff]
        %v183 = vld [vmem:[%s1 + $0x30] sm:$0xff]
        %v184 = vld [vmem:[%s1 + $0x38] sm:$0xff]
        %v185 = vld [vmem:[%s1 + $0x40] sm:$0xff]
        %v186 = vld [vmem:[%s1 + $0x48] sm:$0xff]
        %v187 = vld [vmem:[%s1 + $0x50] sm:$0xff]
        %v188 = vld [vmem:[%s1 + $0x58] sm:$0xff]
        %v189 = vld [vmem:[%s1 + $0x60] sm:$0xff]
        %v190 = vld [vmem:[%s1 + $0x68] sm:$0xff]
        %v191 = vld [vmem:[%s1 + $0x70] sm:$0xff]
        %v192 = vld [vmem:[%s1 + $0x78] sm:$0xff]
        %vm193 = vcmask 523264
        %v195 = vsel %vm193, %v145, 0
        %v198 = vsel %vm193, %v146, 0
        %v201 = vsel %vm193, %v147, 0
        %v204 = vsel %vm193, %v148, 0
        %v207 = vsel %vm193, %v149, 0
        %v210 = vsel %vm193, %v150, 0
        %v213 = vsel %vm193, %v151, 0
        %v216 = vsel %vm193, %v152, 0
        %v219 = vsel %vm193, %v153, 0
        %v222 = vsel %vm193, %v154, 0
        %v225 = vsel %vm193, %v155, 0
        %v228 = vsel %vm193, %v156, 0
        %v231 = vsel %vm193, %v157, 0
        %v234 = vsel %vm193, %v158, 0
        %v237 = vsel %vm193, %v159, 0
        %v240 = vsel %vm193, %v160, 0
        %v243 = vsel %vm193, %v161, 0
        %v246 = vsel %vm193, %v162, 0
        %v249 = vsel %vm193, %v163, 0
        %v252 = vsel %vm193, %v164, 0
        %v255 = vsel %vm193, %v165, 0
        %v258 = vsel %vm193, %v166, 0
        %v261 = vsel %vm193, %v167, 0
        %v264 = vsel %vm193, %v168, 0
        %v267 = vsel %vm193, %v169, 0
        %v270 = vsel %vm193, %v170, 0
        %v273 = vsel %vm193, %v171, 0
        %v276 = vsel %vm193, %v172, 0
        %v279 = vsel %vm193, %v173, 0
        %v282 = vsel %vm193, %v174, 0
        %v285 = vsel %vm193, %v175, 0
        %v288 = vsel %vm193, %v176, 0
        %290 = vmatpush.msra.mxu0 0.0
        %291 = vmatpush.msra.mxu0 0.0
        %292 = vmatpush.msra.mxu0 0.0
        %293 = vmatpush.msra.mxu0 0.0
        %294 = vmatpush.msra.mxu0 0.0
        %295 = vmatpush.msra.mxu0 0.0
        %296 = vmatpush.msra.mxu0 0.0
        %297 = vmatpush.msra.mxu0 0.0
        %298 = vmatpush.msra.mxu0 %v191
        %299 = vmatpush.msra.mxu0 %v189
        %300 = vmatpush.msra.mxu0 %v187
        %301 = vmatpush.msra.mxu0 %v185
        %302 = vmatpush.msra.mxu0 %v183
        %303 = vmatpush.msra.mxu0 %v181
        %304 = vmatpush.msra.mxu0 %v179
        %305 = vmatpush.msra.mxu0 %v177
        %306 = vmatmul.f32.gmra.mxu0 %v195
        %v307 = vpop.f32.mrf.mxu0
        %v308 = vadd.f32 0.0, %v307
        %309 = vmatmul.f32.gmra.mxu0 %v198
        %v310 = vpop.f32.mrf.mxu0
        %v311 = vadd.f32 0.0, %v310
        %312 = vmatmul.f32.gmra.mxu0 %v201
        %v313 = vpop.f32.mrf.mxu0
        %v314 = vadd.f32 0.0, %v313
        %315 = vmatmul.f32.gmra.mxu0 %v204
        %v316 = vpop.f32.mrf.mxu0
        %v317 = vadd.f32 0.0, %v316
        %318 = vmatmul.f32.gmra.mxu0 %v207
        %v319 = vpop.f32.mrf.mxu0
        %v320 = vadd.f32 0.0, %v319
        %321 = vmatmul.f32.gmra.mxu0 %v210
        %v322 = vpop.f32.mrf.mxu0
        %v323 = vadd.f32 0.0, %v322
        %324 = vmatmul.f32.gmra.mxu0 %v213
        %v325 = vpop.f32.mrf.mxu0
        %v326 = vadd.f32 0.0, %v325
        %327 = vmatmul.f32.gmra.mxu0 %v216
        %v328 = vpop.f32.mrf.mxu0
        %v329 = vadd.f32 0.0, %v328
        %330 = vmatmul.f32.gmra.mxu0 %v219
        %v331 = vpop.f32.mrf.mxu0
        %v332 = vadd.f32 0.0, %v331
        %333 = vmatmul.f32.gmra.mxu0 %v222
        %v334 = vpop.f32.mrf.mxu0
        %v335 = vadd.f32 0.0, %v334
        %336 = vmatmul.f32.gmra.mxu0 %v225
        %v337 = vpop.f32.mrf.mxu0
        %v338 = vadd.f32 0.0, %v337
        %339 = vmatmul.f32.gmra.mxu0 %v228
        %v340 = vpop.f32.mrf.mxu0
        %v341 = vadd.f32 0.0, %v340
        %342 = vmatmul.f32.gmra.mxu0 %v231
        %v343 = vpop.f32.mrf.mxu0
        %v344 = vadd.f32 0.0, %v343
        %345 = vmatmul.f32.gmra.mxu0 %v234
        %v346 = vpop.f32.mrf.mxu0
        %v347 = vadd.f32 0.0, %v346
        %348 = vmatmul.f32.gmra.mxu0 %v237
        %v349 = vpop.f32.mrf.mxu0
        %v350 = vadd.f32 0.0, %v349
        %351 = vmatmul.f32.gmra.mxu0 %v240
        %v352 = vpop.f32.mrf.mxu0
        %v353 = vadd.f32 0.0, %v352
        %354 = vmatmul.f32.gmra.mxu0 %v243
        %v355 = vpop.f32.mrf.mxu0
        %v356 = vadd.f32 0.0, %v355
        %357 = vmatmul.f32.gmra.mxu0 %v246
        %v358 = vpop.f32.mrf.mxu0
        %v359 = vadd.f32 0.0, %v358
        %360 = vmatmul.f32.gmra.mxu0 %v249
        %v361 = vpop.f32.mrf.mxu0
        %v362 = vadd.f32 0.0, %v361
        %363 = vmatmul.f32.gmra.mxu0 %v252
        %v364 = vpop.f32.mrf.mxu0
        %v365 = vadd.f32 0.0, %v364
        %366 = vmatmul.f32.gmra.mxu0 %v255
        %v367 = vpop.f32.mrf.mxu0
        %v368 = vadd.f32 0.0, %v367
        %369 = vmatmul.f32.gmra.mxu0 %v258
        %v370 = vpop.f32.mrf.mxu0
        %v371 = vadd.f32 0.0, %v370
        %372 = vmatmul.f32.gmra.mxu0 %v261
        %v373 = vpop.f32.mrf.mxu0
        %v374 = vadd.f32 0.0, %v373
        %375 = vmatmul.f32.gmra.mxu0 %v264
        %v376 = vpop.f32.mrf.mxu0
        %v377 = vadd.f32 0.0, %v376
        %378 = vmatmul.f32.gmra.mxu0 %v267
        %v379 = vpop.f32.mrf.mxu0
        %v380 = vadd.f32 0.0, %v379
        %381 = vmatmul.f32.gmra.mxu0 %v270
        %v382 = vpop.f32.mrf.mxu0
        %v383 = vadd.f32 0.0, %v382
        %384 = vmatmul.f32.gmra.mxu0 %v273
        %v385 = vpop.f32.mrf.mxu0
        %v386 = vadd.f32 0.0, %v385
        %387 = vmatmul.f32.gmra.mxu0 %v276
        %v388 = vpop.f32.mrf.mxu0
        %v389 = vadd.f32 0.0, %v388
        %390 = vmatmul.f32.gmra.mxu0 %v279
        %v391 = vpop.f32.mrf.mxu0
        %v392 = vadd.f32 0.0, %v391
        %393 = vmatmul.f32.gmra.mxu0 %v282
        %v394 = vpop.f32.mrf.mxu0
        %v395 = vadd.f32 0.0, %v394
        %396 = vmatmul.f32.gmra.mxu0 %v285
        %v397 = vpop.f32.mrf.mxu0
        %v398 = vadd.f32 0.0, %v397
        %399 = vmatmul.f32.gmra.mxu0 %v288
        %v400 = vpop.f32.mrf.mxu0
        %v401 = vadd.f32 0.0, %v400
        %402 = vdwg.mxu0
        %403 = vmatpush.msra.mxu0 0.0
        %404 = vmatpush.msra.mxu0 0.0
        %405 = vmatpush.msra.mxu0 0.0
        %406 = vmatpush.msra.mxu0 0.0
        %407 = vmatpush.msra.mxu0 0.0
        %408 = vmatpush.msra.mxu0 0.0
        %409 = vmatpush.msra.mxu0 0.0
        %410 = vmatpush.msra.mxu0 0.0
        %411 = vmatpush.msra.mxu0 %v192
        %412 = vmatpush.msra.mxu0 %v190
        %413 = vmatpush.msra.mxu0 %v188
        %414 = vmatpush.msra.mxu0 %v186
        %415 = vmatpush.msra.mxu0 %v184
        %416 = vmatpush.msra.mxu0 %v182
        %417 = vmatpush.msra.mxu0 %v180
        %418 = vmatpush.msra.mxu0 %v178
        %419 = vmatmul.f32.gmra.mxu0 %v195
        %v420 = vpop.f32.mrf.mxu0
        %v421 = vadd.f32 0.0, %v420
        %422 = vmatmul.f32.gmra.mxu0 %v198
        %v423 = vpop.f32.mrf.mxu0
        %v424 = vadd.f32 0.0, %v423
        %425 = vmatmul.f32.gmra.mxu0 %v201
        %v426 = vpop.f32.mrf.mxu0
        %v427 = vadd.f32 0.0, %v426
        %428 = vmatmul.f32.gmra.mxu0 %v204
        %v429 = vpop.f32.mrf.mxu0
        %v430 = vadd.f32 0.0, %v429
        %431 = vmatmul.f32.gmra.mxu0 %v207
        %v432 = vpop.f32.mrf.mxu0
        %v433 = vadd.f32 0.0, %v432
        %434 = vmatmul.f32.gmra.mxu0 %v210
        %v435 = vpop.f32.mrf.mxu0
        %v436 = vadd.f32 0.0, %v435
        %437 = vmatmul.f32.gmra.mxu0 %v213
        %v438 = vpop.f32.mrf.mxu0
        %v439 = vadd.f32 0.0, %v438
        %440 = vmatmul.f32.gmra.mxu0 %v216
        %v441 = vpop.f32.mrf.mxu0
        %v442 = vadd.f32 0.0, %v441
        %443 = vmatmul.f32.gmra.mxu0 %v219
        %v444 = vpop.f32.mrf.mxu0
        %v445 = vadd.f32 0.0, %v444
        %446 = vmatmul.f32.gmra.mxu0 %v222
        %v447 = vpop.f32.mrf.mxu0
        %v448 = vadd.f32 0.0, %v447
        %449 = vmatmul.f32.gmra.mxu0 %v225
        %v450 = vpop.f32.mrf.mxu0
        %v451 = vadd.f32 0.0, %v450
        %452 = vmatmul.f32.gmra.mxu0 %v228
        %v453 = vpop.f32.mrf.mxu0
        %v454 = vadd.f32 0.0, %v453
        %455 = vmatmul.f32.gmra.mxu0 %v231
        %v456 = vpop.f32.mrf.mxu0
        %v457 = vadd.f32 0.0, %v456
        %458 = vmatmul.f32.gmra.mxu0 %v234
        %v459 = vpop.f32.mrf.mxu0
        %v460 = vadd.f32 0.0, %v459
        %461 = vmatmul.f32.gmra.mxu0 %v237
        %v462 = vpop.f32.mrf.mxu0
        %v463 = vadd.f32 0.0, %v462
        %464 = vmatmul.f32.gmra.mxu0 %v240
        %v465 = vpop.f32.mrf.mxu0
        %v466 = vadd.f32 0.0, %v465
        %467 = vmatmul.f32.gmra.mxu0 %v243
        %v468 = vpop.f32.mrf.mxu0
        %v469 = vadd.f32 0.0, %v468
        %470 = vmatmul.f32.gmra.mxu0 %v246
        %v471 = vpop.f32.mrf.mxu0
        %v472 = vadd.f32 0.0, %v471
        %473 = vmatmul.f32.gmra.mxu0 %v249
        %v474 = vpop.f32.mrf.mxu0
        %v475 = vadd.f32 0.0, %v474
        %476 = vmatmul.f32.gmra.mxu0 %v252
        %v477 = vpop.f32.mrf.mxu0
        %v478 = vadd.f32 0.0, %v477
        %479 = vmatmul.f32.gmra.mxu0 %v255
        %v480 = vpop.f32.mrf.mxu0
        %v481 = vadd.f32 0.0, %v480
        %482 = vmatmul.f32.gmra.mxu0 %v258
        %v483 = vpop.f32.mrf.mxu0
        %v484 = vadd.f32 0.0, %v483
        %485 = vmatmul.f32.gmra.mxu0 %v261
        %v486 = vpop.f32.mrf.mxu0
        %v487 = vadd.f32 0.0, %v486
        %488 = vmatmul.f32.gmra.mxu0 %v264
        %v489 = vpop.f32.mrf.mxu0
        %v490 = vadd.f32 0.0, %v489
        %491 = vmatmul.f32.gmra.mxu0 %v267
        %v492 = vpop.f32.mrf.mxu0
        %v493 = vadd.f32 0.0, %v492
        %494 = vmatmul.f32.gmra.mxu0 %v270
        %v495 = vpop.f32.mrf.mxu0
        %v496 = vadd.f32 0.0, %v495
        %497 = vmatmul.f32.gmra.mxu0 %v273
        %v498 = vpop.f32.mrf.mxu0
        %v499 = vadd.f32 0.0, %v498
        %500 = vmatmul.f32.gmra.mxu0 %v276
        %v501 = vpop.f32.mrf.mxu0
        %v502 = vadd.f32 0.0, %v501
        %503 = vmatmul.f32.gmra.mxu0 %v279
        %v504 = vpop.f32.mrf.mxu0
        %v505 = vadd.f32 0.0, %v504
        %506 = vmatmul.f32.gmra.mxu0 %v282
        %v507 = vpop.f32.mrf.mxu0
        %v508 = vadd.f32 0.0, %v507
        %509 = vmatmul.f32.gmra.mxu0 %v285
        %v510 = vpop.f32.mrf.mxu0
        %v511 = vadd.f32 0.0, %v510
        %512 = vmatmul.f32.gmra.mxu0 %v288
        %v513 = vpop.f32.mrf.mxu0
        %v514 = vadd.f32 0.0, %v513
        %515 = vdwg.mxu0
        %v516 = vmul.f32 %v308, %v308
        %v517 = vmul.f32 %v311, %v311
        %v518 = vmul.f32 %v314, %v314
        %v519 = vmul.f32 %v317, %v317
        %v520 = vmul.f32 %v320, %v320
        %v521 = vmul.f32 %v323, %v323
        %v522 = vmul.f32 %v326, %v326
        %v523 = vmul.f32 %v329, %v329
        %v524 = vmul.f32 %v332, %v332
        %v525 = vmul.f32 %v335, %v335
        %v526 = vmul.f32 %v338, %v338
        %v527 = vmul.f32 %v341, %v341
        %v528 = vmul.f32 %v344, %v344
        %v529 = vmul.f32 %v347, %v347
        %v530 = vmul.f32 %v350, %v350
        %v531 = vmul.f32 %v353, %v353
        %v532 = vmul.f32 %v356, %v356
        %v533 = vmul.f32 %v359, %v359
        %v534 = vmul.f32 %v362, %v362
        %v535 = vmul.f32 %v365, %v365
        %v536 = vmul.f32 %v368, %v368
        %v537 = vmul.f32 %v371, %v371
        %v538 = vmul.f32 %v374, %v374
        %v539 = vmul.f32 %v377, %v377
        %v540 = vmul.f32 %v380, %v380
        %v541 = vmul.f32 %v383, %v383
        %v542 = vmul.f32 %v386, %v386
        %v543 = vmul.f32 %v389, %v389
        %v544 = vmul.f32 %v392, %v392
        %v545 = vmul.f32 %v395, %v395
        %v546 = vmul.f32 %v398, %v398
        %v547 = vmul.f32 %v401, %v401
        %v548 = vmul.f32 %v421, %v421
        %v549 = vmul.f32 %v424, %v424
        %v550 = vmul.f32 %v427, %v427
        %v551 = vmul.f32 %v430, %v430
        %v552 = vmul.f32 %v433, %v433
        %v553 = vmul.f32 %v436, %v436
        %v554 = vmul.f32 %v439, %v439
        %v555 = vmul.f32 %v442, %v442
        %v556 = vmul.f32 %v445, %v445
        %v557 = vmul.f32 %v448, %v448
        %v558 = vmul.f32 %v451, %v451
        %v559 = vmul.f32 %v454, %v454
        %v560 = vmul.f32 %v457, %v457
        %v561 = vmul.f32 %v460, %v460
        %v562 = vmul.f32 %v463, %v463
        %v563 = vmul.f32 %v466, %v466
        %v564 = vmul.f32 %v469, %v469
        %v565 = vmul.f32 %v472, %v472
        %v566 = vmul.f32 %v475, %v475
        %v567 = vmul.f32 %v478, %v478
        %v568 = vmul.f32 %v481, %v481
        %v569 = vmul.f32 %v484, %v484
        %v570 = vmul.f32 %v487, %v487
        %v571 = vmul.f32 %v490, %v490
        %v572 = vmul.f32 %v493, %v493
        %v573 = vmul.f32 %v496, %v496
        %v574 = vmul.f32 %v499, %v499
        %v575 = vmul.f32 %v502, %v502
        %v576 = vmul.f32 %v505, %v505
        %v577 = vmul.f32 %v508, %v508
        %v578 = vmul.f32 %v511, %v511
        %v579 = vmul.f32 %v514, %v514
        %v580 = vadd.f32 %v516, %v548
        %v581 = vadd.f32 %v517, %v549
        %v582 = vadd.f32 %v518, %v550
        %v583 = vadd.f32 %v519, %v551
        %v584 = vadd.f32 %v520, %v552
        %v585 = vadd.f32 %v521, %v553
        %v586 = vadd.f32 %v522, %v554
        %v587 = vadd.f32 %v523, %v555
        %v588 = vadd.f32 %v524, %v556
        %v589 = vadd.f32 %v525, %v557
        %v590 = vadd.f32 %v526, %v558
        %v591 = vadd.f32 %v527, %v559
        %v592 = vadd.f32 %v528, %v560
        %v593 = vadd.f32 %v529, %v561
        %v594 = vadd.f32 %v530, %v562
        %v595 = vadd.f32 %v531, %v563
        %v596 = vadd.f32 %v532, %v564
        %v597 = vadd.f32 %v533, %v565
        %v598 = vadd.f32 %v534, %v566
        %v599 = vadd.f32 %v535, %v567
        %v600 = vadd.f32 %v536, %v568
        %v601 = vadd.f32 %v537, %v569
        %v602 = vadd.f32 %v538, %v570
        %v603 = vadd.f32 %v539, %v571
        %v604 = vadd.f32 %v540, %v572
        %v605 = vadd.f32 %v541, %v573
        %v606 = vadd.f32 %v542, %v574
        %v607 = vadd.f32 %v543, %v575
        %v608 = vadd.f32 %v544, %v576
        %v609 = vadd.f32 %v545, %v577
        %v610 = vadd.f32 %v546, %v578
        %v611 = vadd.f32 %v547, %v579
        %v612 = vmax.f32 %v580, 1e-14
        %v613 = vmax.f32 %v581, 1e-14
        %v614 = vmax.f32 %v582, 1e-14
        %v615 = vmax.f32 %v583, 1e-14
        %v616 = vmax.f32 %v584, 1e-14
        %v617 = vmax.f32 %v585, 1e-14
        %v618 = vmax.f32 %v586, 1e-14
        %v619 = vmax.f32 %v587, 1e-14
        %v620 = vmax.f32 %v588, 1e-14
        %v621 = vmax.f32 %v589, 1e-14
        %v622 = vmax.f32 %v590, 1e-14
        %v623 = vmax.f32 %v591, 1e-14
        %v624 = vmax.f32 %v592, 1e-14
        %v625 = vmax.f32 %v593, 1e-14
        %v626 = vmax.f32 %v594, 1e-14
        %v627 = vmax.f32 %v595, 1e-14
        %v628 = vmax.f32 %v596, 1e-14
        %v629 = vmax.f32 %v597, 1e-14
        %v630 = vmax.f32 %v598, 1e-14
        %v631 = vmax.f32 %v599, 1e-14
        %v632 = vmax.f32 %v600, 1e-14
        %v633 = vmax.f32 %v601, 1e-14
        %v634 = vmax.f32 %v602, 1e-14
        %v635 = vmax.f32 %v603, 1e-14
        %v636 = vmax.f32 %v604, 1e-14
        %v637 = vmax.f32 %v605, 1e-14
        %v638 = vmax.f32 %v606, 1e-14
        %v639 = vmax.f32 %v607, 1e-14
        %v640 = vmax.f32 %v608, 1e-14
        %v641 = vmax.f32 %v609, 1e-14
        %v642 = vmax.f32 %v610, 1e-14
        %v643 = vmax.f32 %v611, 1e-14
        %v644 = vlog2.pop %v612
        %v645 = vmul.f32 %v644, 0.6931472
        %v646 = vlog2.pop %v613
        %v647 = vmul.f32 %v646, 0.6931472
        %v648 = vlog2.pop %v614
        %v649 = vmul.f32 %v648, 0.6931472
        %v650 = vlog2.pop %v615
        %v651 = vmul.f32 %v650, 0.6931472
        %v652 = vlog2.pop %v616
        %v653 = vmul.f32 %v652, 0.6931472
        %v654 = vlog2.pop %v617
        %v655 = vmul.f32 %v654, 0.6931472
        %v656 = vlog2.pop %v618
        %v657 = vmul.f32 %v656, 0.6931472
        %v658 = vlog2.pop %v619
        %v659 = vmul.f32 %v658, 0.6931472
        %v660 = vlog2.pop %v620
        %v661 = vmul.f32 %v660, 0.6931472
        %v662 = vlog2.pop %v621
        %v663 = vmul.f32 %v662, 0.6931472
        %v664 = vlog2.pop %v622
        %v665 = vmul.f32 %v664, 0.6931472
        %v666 = vlog2.pop %v623
        %v667 = vmul.f32 %v666, 0.6931472
        %v668 = vlog2.pop %v624
        %v669 = vmul.f32 %v668, 0.6931472
        %v670 = vlog2.pop %v625
        %v671 = vmul.f32 %v670, 0.6931472
        %v672 = vlog2.pop %v626
        %v673 = vmul.f32 %v672, 0.6931472
        %v674 = vlog2.pop %v627
        %v675 = vmul.f32 %v674, 0.6931472
        %v676 = vlog2.pop %v628
        %v677 = vmul.f32 %v676, 0.6931472
        %v678 = vlog2.pop %v629
        %v679 = vmul.f32 %v678, 0.6931472
        %v680 = vlog2.pop %v630
        %v681 = vmul.f32 %v680, 0.6931472
        %v682 = vlog2.pop %v631
        %v683 = vmul.f32 %v682, 0.6931472
        %v684 = vlog2.pop %v632
        %v685 = vmul.f32 %v684, 0.6931472
        %v686 = vlog2.pop %v633
        %v687 = vmul.f32 %v686, 0.6931472
        %v688 = vlog2.pop %v634
        %v689 = vmul.f32 %v688, 0.6931472
        %v690 = vlog2.pop %v635
        %v691 = vmul.f32 %v690, 0.6931472
        %v692 = vlog2.pop %v636
        %v693 = vmul.f32 %v692, 0.6931472
        %v694 = vlog2.pop %v637
        %v695 = vmul.f32 %v694, 0.6931472
        %v696 = vlog2.pop %v638
        %v697 = vmul.f32 %v696, 0.6931472
        %v698 = vlog2.pop %v639
        %v699 = vmul.f32 %v698, 0.6931472
        %v700 = vlog2.pop %v640
        %v701 = vmul.f32 %v700, 0.6931472
        %v702 = vlog2.pop %v641
        %v703 = vmul.f32 %v702, 0.6931472
        %v704 = vlog2.pop %v642
        %v705 = vmul.f32 %v704, 0.6931472
        %v706 = vlog2.pop %v643
        %v707 = vmul.f32 %v706, 0.6931472
        %v708 = vmul.f32 %v645, 4.3429446
        %v709 = vmul.f32 %v647, 4.3429446
        %v710 = vmul.f32 %v649, 4.3429446
        %v711 = vmul.f32 %v651, 4.3429446
        %v712 = vmul.f32 %v653, 4.3429446
        %v713 = vmul.f32 %v655, 4.3429446
        %v714 = vmul.f32 %v657, 4.3429446
        %v715 = vmul.f32 %v659, 4.3429446
        %v716 = vmul.f32 %v661, 4.3429446
        %v717 = vmul.f32 %v663, 4.3429446
        %v718 = vmul.f32 %v665, 4.3429446
        %v719 = vmul.f32 %v667, 4.3429446
        %v720 = vmul.f32 %v669, 4.3429446
        %v721 = vmul.f32 %v671, 4.3429446
        %v722 = vmul.f32 %v673, 4.3429446
        %v723 = vmul.f32 %v675, 4.3429446
        %v724 = vmul.f32 %v677, 4.3429446
        %v725 = vmul.f32 %v679, 4.3429446
        %v726 = vmul.f32 %v681, 4.3429446
        %v727 = vmul.f32 %v683, 4.3429446
        %v728 = vmul.f32 %v685, 4.3429446
        %v729 = vmul.f32 %v687, 4.3429446
        %v730 = vmul.f32 %v689, 4.3429446
        %v731 = vmul.f32 %v691, 4.3429446
        %v732 = vmul.f32 %v693, 4.3429446
        %v733 = vmul.f32 %v695, 4.3429446
        %v734 = vmul.f32 %v697, 4.3429446
        %v735 = vmul.f32 %v699, 4.3429446
        %v736 = vmul.f32 %v701, 4.3429446
        %v737 = vmul.f32 %v703, 4.3429446
        %v738 = vmul.f32 %v705, 4.3429446
        %v739 = vmul.f32 %v707, 4.3429446
        %v740 = vsub.f32 %v708, 25.0
        %v741 = vsub.f32 %v709, 25.0
        %v742 = vsub.f32 %v710, 25.0
        %v743 = vsub.f32 %v711, 25.0
        %v744 = vsub.f32 %v712, 25.0
        %v745 = vsub.f32 %v713, 25.0
        %v746 = vsub.f32 %v714, 25.0
        %v747 = vsub.f32 %v715, 25.0
        %v748 = vsub.f32 %v716, 25.0
        %v749 = vsub.f32 %v717, 25.0
        %v750 = vsub.f32 %v718, 25.0
        %v751 = vsub.f32 %v719, 25.0
        %v752 = vsub.f32 %v720, 25.0
        %v753 = vsub.f32 %v721, 25.0
        %v754 = vsub.f32 %v722, 25.0
        %v755 = vsub.f32 %v723, 25.0
        %v756 = vsub.f32 %v724, 25.0
        %v757 = vsub.f32 %v725, 25.0
        %v758 = vsub.f32 %v726, 25.0
        %v759 = vsub.f32 %v727, 25.0
        %v760 = vsub.f32 %v728, 25.0
        %v761 = vsub.f32 %v729, 25.0
        %v762 = vsub.f32 %v730, 25.0
        %v763 = vsub.f32 %v731, 25.0
        %v764 = vsub.f32 %v732, 25.0
        %v765 = vsub.f32 %v733, 25.0
        %v766 = vsub.f32 %v734, 25.0
        %v767 = vsub.f32 %v735, 25.0
        %v768 = vsub.f32 %v736, 25.0
        %v769 = vsub.f32 %v737, 25.0
        %v770 = vsub.f32 %v738, 25.0
        %v771 = vsub.f32 %v739, 25.0
        %v772 = vsub.f32 %v740, -100.0
        %v773 = vsub.f32 %v741, -100.0
        %v774 = vsub.f32 %v742, -100.0
        %v775 = vsub.f32 %v743, -100.0
        %v776 = vsub.f32 %v744, -100.0
        %v777 = vsub.f32 %v745, -100.0
        %v778 = vsub.f32 %v746, -100.0
        %v779 = vsub.f32 %v747, -100.0
        %v780 = vsub.f32 %v748, -100.0
        %v781 = vsub.f32 %v749, -100.0
        %v782 = vsub.f32 %v750, -100.0
        %v783 = vsub.f32 %v751, -100.0
        %v784 = vsub.f32 %v752, -100.0
        %v785 = vsub.f32 %v753, -100.0
        %v786 = vsub.f32 %v754, -100.0
        %v787 = vsub.f32 %v755, -100.0
        %v788 = vsub.f32 %v756, -100.0
        %v789 = vsub.f32 %v757, -100.0
        %v790 = vsub.f32 %v758, -100.0
        %v791 = vsub.f32 %v759, -100.0
        %v792 = vsub.f32 %v760, -100.0
        %v793 = vsub.f32 %v761, -100.0
        %v794 = vsub.f32 %v762, -100.0
        %v795 = vsub.f32 %v763, -100.0
        %v796 = vsub.f32 %v764, -100.0
        %v797 = vsub.f32 %v765, -100.0
        %v798 = vsub.f32 %v766, -100.0
        %v799 = vsub.f32 %v767, -100.0
        %v800 = vsub.f32 %v768, -100.0
        %v801 = vsub.f32 %v769, -100.0
        %v802 = vsub.f32 %v770, -100.0
        %v803 = vsub.f32 %v771, -100.0
        %v804 = vrcp.pop 100.0
        %v805 = vmul.f32 100.0, %v804
        %v806 = vsub.f32 1.0, %v805
        %v807 = vmul.f32 %v804, %v806
        %v808 = vadd.f32 %v804, %v807
        %vm809 = vweird.f32 %v804
        %v810 = vsel %vm809, %v804, %v808
        %v811 = vmul.f32 %v772, %v810
        %v812 = vmul.f32 %v773, %v810
        %v813 = vmul.f32 %v774, %v810
        %v814 = vmul.f32 %v775, %v810
        %v815 = vmul.f32 %v776, %v810
        %v816 = vmul.f32 %v777, %v810
        %v817 = vmul.f32 %v778, %v810
        %v818 = vmul.f32 %v779, %v810
        %v819 = vmul.f32 %v780, %v810
        %v820 = vmul.f32 %v781, %v810
        %v821 = vmul.f32 %v782, %v810
        %v822 = vmul.f32 %v783, %v810
        %v823 = vmul.f32 %v784, %v810
        %v824 = vmul.f32 %v785, %v810
        %v825 = vmul.f32 %v786, %v810
        %v826 = vmul.f32 %v787, %v810
        %v827 = vmul.f32 %v788, %v810
        %v828 = vmul.f32 %v789, %v810
        %v829 = vmul.f32 %v790, %v810
        %v830 = vmul.f32 %v791, %v810
        %v831 = vmul.f32 %v792, %v810
        %v832 = vmul.f32 %v793, %v810
        %v833 = vmul.f32 %v794, %v810
        %v834 = vmul.f32 %v795, %v810
        %v835 = vmul.f32 %v796, %v810
        %v836 = vmul.f32 %v797, %v810
        %v837 = vmul.f32 %v798, %v810
        %v838 = vmul.f32 %v799, %v810
        %v839 = vmul.f32 %v800, %v810
        %v840 = vmul.f32 %v801, %v810
        %v841 = vmul.f32 %v802, %v810
        %v842 = vmul.f32 %v803, %v810
        %v843 = vmul.f32 %v811, 2.0
        %v844 = vmul.f32 %v812, 2.0
        %v845 = vmul.f32 %v813, 2.0
        %v846 = vmul.f32 %v814, 2.0
        %v847 = vmul.f32 %v815, 2.0
        %v848 = vmul.f32 %v816, 2.0
        %v849 = vmul.f32 %v817, 2.0
        %v850 = vmul.f32 %v818, 2.0
        %v851 = vmul.f32 %v819, 2.0
        %v852 = vmul.f32 %v820, 2.0
        %v853 = vmul.f32 %v821, 2.0
        %v854 = vmul.f32 %v822, 2.0
        %v855 = vmul.f32 %v823, 2.0
        %v856 = vmul.f32 %v824, 2.0
        %v857 = vmul.f32 %v825, 2.0
        %v858 = vmul.f32 %v826, 2.0
        %v859 = vmul.f32 %v827, 2.0
        %v860 = vmul.f32 %v828, 2.0
        %v861 = vmul.f32 %v829, 2.0
        %v862 = vmul.f32 %v830, 2.0
        %v863 = vmul.f32 %v831, 2.0
        %v864 = vmul.f32 %v832, 2.0
        %v865 = vmul.f32 %v833, 2.0
        %v866 = vmul.f32 %v834, 2.0
        %v867 = vmul.f32 %v835, 2.0
        %v868 = vmul.f32 %v836, 2.0
        %v869 = vmul.f32 %v837, 2.0
        %v870 = vmul.f32 %v838, 2.0
        %v871 = vmul.f32 %v839, 2.0
        %v872 = vmul.f32 %v840, 2.0
        %v873 = vmul.f32 %v841, 2.0
        %v874 = vmul.f32 %v842, 2.0
        %v875 = vsub.f32 %v843, 1.0
        %v876 = vsub.f32 %v844, 1.0
        %v877 = vsub.f32 %v845, 1.0
        %v878 = vsub.f32 %v846, 1.0
        %v879 = vsub.f32 %v847, 1.0
        %v880 = vsub.f32 %v848, 1.0
        %v881 = vsub.f32 %v849, 1.0
        %v882 = vsub.f32 %v850, 1.0
        %v883 = vsub.f32 %v851, 1.0
        %v884 = vsub.f32 %v852, 1.0
        %v885 = vsub.f32 %v853, 1.0
        %v886 = vsub.f32 %v854, 1.0
        %v887 = vsub.f32 %v855, 1.0
        %v888 = vsub.f32 %v856, 1.0
        %v889 = vsub.f32 %v857, 1.0
        %v890 = vsub.f32 %v858, 1.0
        %v891 = vsub.f32 %v859, 1.0
        %v892 = vsub.f32 %v860, 1.0
        %v893 = vsub.f32 %v861, 1.0
        %v894 = vsub.f32 %v862, 1.0
        %v895 = vsub.f32 %v863, 1.0
        %v896 = vsub.f32 %v864, 1.0
        %v897 = vsub.f32 %v865, 1.0
        %v898 = vsub.f32 %v866, 1.0
        %v899 = vsub.f32 %v867, 1.0
        %v900 = vsub.f32 %v868, 1.0
        %v901 = vsub.f32 %v869, 1.0
        %v902 = vsub.f32 %v870, 1.0
        %v903 = vsub.f32 %v871, 1.0
        %v904 = vsub.f32 %v872, 1.0
        %v905 = vsub.f32 %v873, 1.0
        %v906 = vsub.f32 %v874, 1.0
        %v907 = vmax.f32 %v875, -1.0
        %v908 = vmax.f32 %v876, -1.0
        %v909 = vmax.f32 %v877, -1.0
        %v910 = vmax.f32 %v878, -1.0
        %v911 = vmax.f32 %v879, -1.0
        %v912 = vmax.f32 %v880, -1.0
        %v913 = vmax.f32 %v881, -1.0
        %v914 = vmax.f32 %v882, -1.0
        %v915 = vmax.f32 %v883, -1.0
        %v916 = vmax.f32 %v884, -1.0
        %v917 = vmax.f32 %v885, -1.0
        %v918 = vmax.f32 %v886, -1.0
        %v919 = vmax.f32 %v887, -1.0
        %v920 = vmax.f32 %v888, -1.0
        %v921 = vmax.f32 %v889, -1.0
        %v922 = vmax.f32 %v890, -1.0
        %v923 = vmax.f32 %v891, -1.0
        %v924 = vmax.f32 %v892, -1.0
        %v925 = vmax.f32 %v893, -1.0
        %v926 = vmax.f32 %v894, -1.0
        %v927 = vmax.f32 %v895, -1.0
        %v928 = vmax.f32 %v896, -1.0
        %v929 = vmax.f32 %v897, -1.0
        %v930 = vmax.f32 %v898, -1.0
        %v931 = vmax.f32 %v899, -1.0
        %v932 = vmax.f32 %v900, -1.0
        %v933 = vmax.f32 %v901, -1.0
        %v934 = vmax.f32 %v902, -1.0
        %v935 = vmax.f32 %v903, -1.0
        %v936 = vmax.f32 %v904, -1.0
        %v937 = vmax.f32 %v905, -1.0
        %v938 = vmax.f32 %v906, -1.0
        %v939 = vmin.f32 %v907, 1.0
        %v940 = vmin.f32 %v908, 1.0
        %v941 = vmin.f32 %v909, 1.0
        %v942 = vmin.f32 %v910, 1.0
        %v943 = vmin.f32 %v911, 1.0
        %v944 = vmin.f32 %v912, 1.0
        %v945 = vmin.f32 %v913, 1.0
        %v946 = vmin.f32 %v914, 1.0
        %v947 = vmin.f32 %v915, 1.0
        %v948 = vmin.f32 %v916, 1.0
        %v949 = vmin.f32 %v917, 1.0
        %v950 = vmin.f32 %v918, 1.0
        %v951 = vmin.f32 %v919, 1.0
        %v952 = vmin.f32 %v920, 1.0
        %v953 = vmin.f32 %v921, 1.0
        %v954 = vmin.f32 %v922, 1.0
        %v955 = vmin.f32 %v923, 1.0
        %v956 = vmin.f32 %v924, 1.0
        %v957 = vmin.f32 %v925, 1.0
        %v958 = vmin.f32 %v926, 1.0
        %v959 = vmin.f32 %v927, 1.0
        %v960 = vmin.f32 %v928, 1.0
        %v961 = vmin.f32 %v929, 1.0
        %v962 = vmin.f32 %v930, 1.0
        %v963 = vmin.f32 %v931, 1.0
        %v964 = vmin.f32 %v932, 1.0
        %v965 = vmin.f32 %v933, 1.0
        %v966 = vmin.f32 %v934, 1.0
        %v967 = vmin.f32 %v935, 1.0
        %v968 = vmin.f32 %v936, 1.0
        %v969 = vmin.f32 %v937, 1.0
        %v970 = vmin.f32 %v938, 1.0
        %v971 = vmax.f32 %v580, 1e-30
        %v972 = vmax.f32 %v581, 1e-30
        %v973 = vmax.f32 %v582, 1e-30
        %v974 = vmax.f32 %v583, 1e-30
        %v975 = vmax.f32 %v584, 1e-30
        %v976 = vmax.f32 %v585, 1e-30
        %v977 = vmax.f32 %v586, 1e-30
        %v978 = vmax.f32 %v587, 1e-30
        %v979 = vmax.f32 %v588, 1e-30
        %v980 = vmax.f32 %v589, 1e-30
        %v981 = vmax.f32 %v590, 1e-30
        %v982 = vmax.f32 %v591, 1e-30
        %v983 = vmax.f32 %v592, 1e-30
        %v984 = vmax.f32 %v593, 1e-30
        %v985 = vmax.f32 %v594, 1e-30
        %v986 = vmax.f32 %v595, 1e-30
        %v987 = vmax.f32 %v596, 1e-30
        %v988 = vmax.f32 %v597, 1e-30
        %v989 = vmax.f32 %v598, 1e-30
        %v990 = vmax.f32 %v599, 1e-30
        %v991 = vmax.f32 %v600, 1e-30
        %v992 = vmax.f32 %v601, 1e-30
        %v993 = vmax.f32 %v602, 1e-30
        %v994 = vmax.f32 %v603, 1e-30
        %v995 = vmax.f32 %v604, 1e-30
        %v996 = vmax.f32 %v605, 1e-30
        %v997 = vmax.f32 %v606, 1e-30
        %v998 = vmax.f32 %v607, 1e-30
        %v999 = vmax.f32 %v608, 1e-30
        %v1000 = vmax.f32 %v609, 1e-30
        %v1001 = vmax.f32 %v610, 1e-30
        %v1002 = vmax.f32 %v611, 1e-30
        %v1003 = vrsqrt.pop %v971
        %v1004 = vmul.f32 %v1003, %v971
        %v1005 = vmul.f32 %v1004, %v1003
        %v1006 = vmul.f32 0.5, %v1005
        %v1007 = vsub.f32 1.5, %v1006
        %v1008 = vmul.f32 %v1003, %v1007
        %vm1009 = vweird.f32 %v971
        %vm1010 = vweird.f32 %v1003
        %vm1011 = vmor %vm1009, %vm1010
        %v1012 = vsel %vm1011, %v1003, %v1008
        %v1013 = vrsqrt.pop %v972
        %v1014 = vmul.f32 %v1013, %v972
        %v1015 = vmul.f32 %v1014, %v1013
        %v1016 = vmul.f32 0.5, %v1015
        %v1017 = vsub.f32 1.5, %v1016
        %v1018 = vmul.f32 %v1013, %v1017
        %vm1019 = vweird.f32 %v972
        %vm1020 = vweird.f32 %v1013
        %vm1021 = vmor %vm1019, %vm1020
        %v1022 = vsel %vm1021, %v1013, %v1018
        %v1023 = vrsqrt.pop %v973
        %v1024 = vmul.f32 %v1023, %v973
        %v1025 = vmul.f32 %v1024, %v1023
        %v1026 = vmul.f32 0.5, %v1025
        %v1027 = vsub.f32 1.5, %v1026
        %v1028 = vmul.f32 %v1023, %v1027
        %vm1029 = vweird.f32 %v973
        %vm1030 = vweird.f32 %v1023
        %vm1031 = vmor %vm1029, %vm1030
        %v1032 = vsel %vm1031, %v1023, %v1028
        %v1033 = vrsqrt.pop %v974
        %v1034 = vmul.f32 %v1033, %v974
        %v1035 = vmul.f32 %v1034, %v1033
        %v1036 = vmul.f32 0.5, %v1035
        %v1037 = vsub.f32 1.5, %v1036
        %v1038 = vmul.f32 %v1033, %v1037
        %vm1039 = vweird.f32 %v974
        %vm1040 = vweird.f32 %v1033
        %vm1041 = vmor %vm1039, %vm1040
        %v1042 = vsel %vm1041, %v1033, %v1038
        %v1043 = vrsqrt.pop %v975
        %v1044 = vmul.f32 %v1043, %v975
        %v1045 = vmul.f32 %v1044, %v1043
        %v1046 = vmul.f32 0.5, %v1045
        %v1047 = vsub.f32 1.5, %v1046
        %v1048 = vmul.f32 %v1043, %v1047
        %vm1049 = vweird.f32 %v975
        %vm1050 = vweird.f32 %v1043
        %vm1051 = vmor %vm1049, %vm1050
        %v1052 = vsel %vm1051, %v1043, %v1048
        %v1053 = vrsqrt.pop %v976
        %v1054 = vmul.f32 %v1053, %v976
        %v1055 = vmul.f32 %v1054, %v1053
        %v1056 = vmul.f32 0.5, %v1055
        %v1057 = vsub.f32 1.5, %v1056
        %v1058 = vmul.f32 %v1053, %v1057
        %vm1059 = vweird.f32 %v976
        %vm1060 = vweird.f32 %v1053
        %vm1061 = vmor %vm1059, %vm1060
        %v1062 = vsel %vm1061, %v1053, %v1058
        %v1063 = vrsqrt.pop %v977
        %v1064 = vmul.f32 %v1063, %v977
        %v1065 = vmul.f32 %v1064, %v1063
        %v1066 = vmul.f32 0.5, %v1065
        %v1067 = vsub.f32 1.5, %v1066
        %v1068 = vmul.f32 %v1063, %v1067
        %vm1069 = vweird.f32 %v977
        %vm1070 = vweird.f32 %v1063
        %vm1071 = vmor %vm1069, %vm1070
        %v1072 = vsel %vm1071, %v1063, %v1068
        %v1073 = vrsqrt.pop %v978
        %v1074 = vmul.f32 %v1073, %v978
        %v1075 = vmul.f32 %v1074, %v1073
        %v1076 = vmul.f32 0.5, %v1075
        %v1077 = vsub.f32 1.5, %v1076
        %v1078 = vmul.f32 %v1073, %v1077
        %vm1079 = vweird.f32 %v978
        %vm1080 = vweird.f32 %v1073
        %vm1081 = vmor %vm1079, %vm1080
        %v1082 = vsel %vm1081, %v1073, %v1078
        %v1083 = vrsqrt.pop %v979
        %v1084 = vmul.f32 %v1083, %v979
        %v1085 = vmul.f32 %v1084, %v1083
        %v1086 = vmul.f32 0.5, %v1085
        %v1087 = vsub.f32 1.5, %v1086
        %v1088 = vmul.f32 %v1083, %v1087
        %vm1089 = vweird.f32 %v979
        %vm1090 = vweird.f32 %v1083
        %vm1091 = vmor %vm1089, %vm1090
        %v1092 = vsel %vm1091, %v1083, %v1088
        %v1093 = vrsqrt.pop %v980
        %v1094 = vmul.f32 %v1093, %v980
        %v1095 = vmul.f32 %v1094, %v1093
        %v1096 = vmul.f32 0.5, %v1095
        %v1097 = vsub.f32 1.5, %v1096
        %v1098 = vmul.f32 %v1093, %v1097
        %vm1099 = vweird.f32 %v980
        %vm1100 = vweird.f32 %v1093
        %vm1101 = vmor %vm1099, %vm1100
        %v1102 = vsel %vm1101, %v1093, %v1098
        %v1103 = vrsqrt.pop %v981
        %v1104 = vmul.f32 %v1103, %v981
        %v1105 = vmul.f32 %v1104, %v1103
        %v1106 = vmul.f32 0.5, %v1105
        %v1107 = vsub.f32 1.5, %v1106
        %v1108 = vmul.f32 %v1103, %v1107
        %vm1109 = vweird.f32 %v981
        %vm1110 = vweird.f32 %v1103
        %vm1111 = vmor %vm1109, %vm1110
        %v1112 = vsel %vm1111, %v1103, %v1108
        %v1113 = vrsqrt.pop %v982
        %v1114 = vmul.f32 %v1113, %v982
        %v1115 = vmul.f32 %v1114, %v1113
        %v1116 = vmul.f32 0.5, %v1115
        %v1117 = vsub.f32 1.5, %v1116
        %v1118 = vmul.f32 %v1113, %v1117
        %vm1119 = vweird.f32 %v982
        %vm1120 = vweird.f32 %v1113
        %vm1121 = vmor %vm1119, %vm1120
        %v1122 = vsel %vm1121, %v1113, %v1118
        %v1123 = vrsqrt.pop %v983
        %v1124 = vmul.f32 %v1123, %v983
        %v1125 = vmul.f32 %v1124, %v1123
        %v1126 = vmul.f32 0.5, %v1125
        %v1127 = vsub.f32 1.5, %v1126
        %v1128 = vmul.f32 %v1123, %v1127
        %vm1129 = vweird.f32 %v983
        %vm1130 = vweird.f32 %v1123
        %vm1131 = vmor %vm1129, %vm1130
        %v1132 = vsel %vm1131, %v1123, %v1128
        %v1133 = vrsqrt.pop %v984
        %v1134 = vmul.f32 %v1133, %v984
        %v1135 = vmul.f32 %v1134, %v1133
        %v1136 = vmul.f32 0.5, %v1135
        %v1137 = vsub.f32 1.5, %v1136
        %v1138 = vmul.f32 %v1133, %v1137
        %vm1139 = vweird.f32 %v984
        %vm1140 = vweird.f32 %v1133
        %vm1141 = vmor %vm1139, %vm1140
        %v1142 = vsel %vm1141, %v1133, %v1138
        %v1143 = vrsqrt.pop %v985
        %v1144 = vmul.f32 %v1143, %v985
        %v1145 = vmul.f32 %v1144, %v1143
        %v1146 = vmul.f32 0.5, %v1145
        %v1147 = vsub.f32 1.5, %v1146
        %v1148 = vmul.f32 %v1143, %v1147
        %vm1149 = vweird.f32 %v985
        %vm1150 = vweird.f32 %v1143
        %vm1151 = vmor %vm1149, %vm1150
        %v1152 = vsel %vm1151, %v1143, %v1148
        %v1153 = vrsqrt.pop %v986
        %v1154 = vmul.f32 %v1153, %v986
        %v1155 = vmul.f32 %v1154, %v1153
        %v1156 = vmul.f32 0.5, %v1155
        %v1157 = vsub.f32 1.5, %v1156
        %v1158 = vmul.f32 %v1153, %v1157
        %vm1159 = vweird.f32 %v986
        %vm1160 = vweird.f32 %v1153
        %vm1161 = vmor %vm1159, %vm1160
        %v1162 = vsel %vm1161, %v1153, %v1158
        %v1163 = vrsqrt.pop %v987
        %v1164 = vmul.f32 %v1163, %v987
        %v1165 = vmul.f32 %v1164, %v1163
        %v1166 = vmul.f32 0.5, %v1165
        %v1167 = vsub.f32 1.5, %v1166
        %v1168 = vmul.f32 %v1163, %v1167
        %vm1169 = vweird.f32 %v987
        %vm1170 = vweird.f32 %v1163
        %vm1171 = vmor %vm1169, %vm1170
        %v1172 = vsel %vm1171, %v1163, %v1168
        %v1173 = vrsqrt.pop %v988
        %v1174 = vmul.f32 %v1173, %v988
        %v1175 = vmul.f32 %v1174, %v1173
        %v1176 = vmul.f32 0.5, %v1175
        %v1177 = vsub.f32 1.5, %v1176
        %v1178 = vmul.f32 %v1173, %v1177
        %vm1179 = vweird.f32 %v988
        %vm1180 = vweird.f32 %v1173
        %vm1181 = vmor %vm1179, %vm1180
        %v1182 = vsel %vm1181, %v1173, %v1178
        %v1183 = vrsqrt.pop %v989
        %v1184 = vmul.f32 %v1183, %v989
        %v1185 = vmul.f32 %v1184, %v1183
        %v1186 = vmul.f32 0.5, %v1185
        %v1187 = vsub.f32 1.5, %v1186
        %v1188 = vmul.f32 %v1183, %v1187
        %vm1189 = vweird.f32 %v989
        %vm1190 = vweird.f32 %v1183
        %vm1191 = vmor %vm1189, %vm1190
        %v1192 = vsel %vm1191, %v1183, %v1188
        %v1193 = vrsqrt.pop %v990
        %v1194 = vmul.f32 %v1193, %v990
        %v1195 = vmul.f32 %v1194, %v1193
        %v1196 = vmul.f32 0.5, %v1195
        %v1197 = vsub.f32 1.5, %v1196
        %v1198 = vmul.f32 %v1193, %v1197
        %vm1199 = vweird.f32 %v990
        %vm1200 = vweird.f32 %v1193
        %vm1201 = vmor %vm1199, %vm1200
        %v1202 = vsel %vm1201, %v1193, %v1198
        %v1203 = vrsqrt.pop %v991
        %v1204 = vmul.f32 %v1203, %v991
        %v1205 = vmul.f32 %v1204, %v1203
        %v1206 = vmul.f32 0.5, %v1205
        %v1207 = vsub.f32 1.5, %v1206
        %v1208 = vmul.f32 %v1203, %v1207
        %vm1209 = vweird.f32 %v991
        %vm1210 = vweird.f32 %v1203
        %vm1211 = vmor %vm1209, %vm1210
        %v1212 = vsel %vm1211, %v1203, %v1208
        %v1213 = vrsqrt.pop %v992
        %v1214 = vmul.f32 %v1213, %v992
        %v1215 = vmul.f32 %v1214, %v1213
        %v1216 = vmul.f32 0.5, %v1215
        %v1217 = vsub.f32 1.5, %v1216
        %v1218 = vmul.f32 %v1213, %v1217
        %vm1219 = vweird.f32 %v992
        %vm1220 = vweird.f32 %v1213
        %vm1221 = vmor %vm1219, %vm1220
        %v1222 = vsel %vm1221, %v1213, %v1218
        %v1223 = vrsqrt.pop %v993
        %v1224 = vmul.f32 %v1223, %v993
        %v1225 = vmul.f32 %v1224, %v1223
        %v1226 = vmul.f32 0.5, %v1225
        %v1227 = vsub.f32 1.5, %v1226
        %v1228 = vmul.f32 %v1223, %v1227
        %vm1229 = vweird.f32 %v993
        %vm1230 = vweird.f32 %v1223
        %vm1231 = vmor %vm1229, %vm1230
        %v1232 = vsel %vm1231, %v1223, %v1228
        %v1233 = vrsqrt.pop %v994
        %v1234 = vmul.f32 %v1233, %v994
        %v1235 = vmul.f32 %v1234, %v1233
        %v1236 = vmul.f32 0.5, %v1235
        %v1237 = vsub.f32 1.5, %v1236
        %v1238 = vmul.f32 %v1233, %v1237
        %vm1239 = vweird.f32 %v994
        %vm1240 = vweird.f32 %v1233
        %vm1241 = vmor %vm1239, %vm1240
        %v1242 = vsel %vm1241, %v1233, %v1238
        %v1243 = vrsqrt.pop %v995
        %v1244 = vmul.f32 %v1243, %v995
        %v1245 = vmul.f32 %v1244, %v1243
        %v1246 = vmul.f32 0.5, %v1245
        %v1247 = vsub.f32 1.5, %v1246
        %v1248 = vmul.f32 %v1243, %v1247
        %vm1249 = vweird.f32 %v995
        %vm1250 = vweird.f32 %v1243
        %vm1251 = vmor %vm1249, %vm1250
        %v1252 = vsel %vm1251, %v1243, %v1248
        %v1253 = vrsqrt.pop %v996
        %v1254 = vmul.f32 %v1253, %v996
        %v1255 = vmul.f32 %v1254, %v1253
        %v1256 = vmul.f32 0.5, %v1255
        %v1257 = vsub.f32 1.5, %v1256
        %v1258 = vmul.f32 %v1253, %v1257
        %vm1259 = vweird.f32 %v996
        %vm1260 = vweird.f32 %v1253
        %vm1261 = vmor %vm1259, %vm1260
        %v1262 = vsel %vm1261, %v1253, %v1258
        %v1263 = vrsqrt.pop %v997
        %v1264 = vmul.f32 %v1263, %v997
        %v1265 = vmul.f32 %v1264, %v1263
        %v1266 = vmul.f32 0.5, %v1265
        %v1267 = vsub.f32 1.5, %v1266
        %v1268 = vmul.f32 %v1263, %v1267
        %vm1269 = vweird.f32 %v997
        %vm1270 = vweird.f32 %v1263
        %vm1271 = vmor %vm1269, %vm1270
        %v1272 = vsel %vm1271, %v1263, %v1268
        %v1273 = vrsqrt.pop %v998
        %v1274 = vmul.f32 %v1273, %v998
        %v1275 = vmul.f32 %v1274, %v1273
        %v1276 = vmul.f32 0.5, %v1275
        %v1277 = vsub.f32 1.5, %v1276
        %v1278 = vmul.f32 %v1273, %v1277
        %vm1279 = vweird.f32 %v998
        %vm1280 = vweird.f32 %v1273
        %vm1281 = vmor %vm1279, %vm1280
        %v1282 = vsel %vm1281, %v1273, %v1278
        %v1283 = vrsqrt.pop %v999
        %v1284 = vmul.f32 %v1283, %v999
        %v1285 = vmul.f32 %v1284, %v1283
        %v1286 = vmul.f32 0.5, %v1285
        %v1287 = vsub.f32 1.5, %v1286
        %v1288 = vmul.f32 %v1283, %v1287
        %vm1289 = vweird.f32 %v999
        %vm1290 = vweird.f32 %v1283
        %vm1291 = vmor %vm1289, %vm1290
        %v1292 = vsel %vm1291, %v1283, %v1288
        %v1293 = vrsqrt.pop %v1000
        %v1294 = vmul.f32 %v1293, %v1000
        %v1295 = vmul.f32 %v1294, %v1293
        %v1296 = vmul.f32 0.5, %v1295
        %v1297 = vsub.f32 1.5, %v1296
        %v1298 = vmul.f32 %v1293, %v1297
        %vm1299 = vweird.f32 %v1000
        %vm1300 = vweird.f32 %v1293
        %vm1301 = vmor %vm1299, %vm1300
        %v1302 = vsel %vm1301, %v1293, %v1298
        %v1303 = vrsqrt.pop %v1001
        %v1304 = vmul.f32 %v1303, %v1001
        %v1305 = vmul.f32 %v1304, %v1303
        %v1306 = vmul.f32 0.5, %v1305
        %v1307 = vsub.f32 1.5, %v1306
        %v1308 = vmul.f32 %v1303, %v1307
        %vm1309 = vweird.f32 %v1001
        %vm1310 = vweird.f32 %v1303
        %vm1311 = vmor %vm1309, %vm1310
        %v1312 = vsel %vm1311, %v1303, %v1308
        %v1313 = vrsqrt.pop %v1002
        %v1314 = vmul.f32 %v1313, %v1002
        %v1315 = vmul.f32 %v1314, %v1313
        %v1316 = vmul.f32 0.5, %v1315
        %v1317 = vsub.f32 1.5, %v1316
        %v1318 = vmul.f32 %v1313, %v1317
        %vm1319 = vweird.f32 %v1002
        %vm1320 = vweird.f32 %v1313
        %vm1321 = vmor %vm1319, %vm1320
        %v1322 = vsel %vm1321, %v1313, %v1318
        %v1323 = vmul.f32 %v971, 0.5
        %v1324 = vmul.f32 %v972, 0.5
        %v1325 = vmul.f32 %v973, 0.5
        %v1326 = vmul.f32 %v974, 0.5
        %v1327 = vmul.f32 %v975, 0.5
        %v1328 = vmul.f32 %v976, 0.5
        %v1329 = vmul.f32 %v977, 0.5
        %v1330 = vmul.f32 %v978, 0.5
        %v1331 = vmul.f32 %v979, 0.5
        %v1332 = vmul.f32 %v980, 0.5
        %v1333 = vmul.f32 %v981, 0.5
        %v1334 = vmul.f32 %v982, 0.5
        %v1335 = vmul.f32 %v983, 0.5
        %v1336 = vmul.f32 %v984, 0.5
        %v1337 = vmul.f32 %v985, 0.5
        %v1338 = vmul.f32 %v986, 0.5
        %v1339 = vmul.f32 %v987, 0.5
        %v1340 = vmul.f32 %v988, 0.5
        %v1341 = vmul.f32 %v989, 0.5
        %v1342 = vmul.f32 %v990, 0.5
        %v1343 = vmul.f32 %v991, 0.5
        %v1344 = vmul.f32 %v992, 0.5
        %v1345 = vmul.f32 %v993, 0.5
        %v1346 = vmul.f32 %v994, 0.5
        %v1347 = vmul.f32 %v995, 0.5
        %v1348 = vmul.f32 %v996, 0.5
        %v1349 = vmul.f32 %v997, 0.5
        %v1350 = vmul.f32 %v998, 0.5
        %v1351 = vmul.f32 %v999, 0.5
        %v1352 = vmul.f32 %v1000, 0.5
        %v1353 = vmul.f32 %v1001, 0.5
        %v1354 = vmul.f32 %v1002, 0.5
        %v1355 = vmul.f32 %v1323, %v1012
        %v1356 = vmul.f32 %v1324, %v1022
        %v1357 = vmul.f32 %v1325, %v1032
        %v1358 = vmul.f32 %v1326, %v1042
        %v1359 = vmul.f32 %v1327, %v1052
        %v1360 = vmul.f32 %v1328, %v1062
        %v1361 = vmul.f32 %v1329, %v1072
        %v1362 = vmul.f32 %v1330, %v1082
        %v1363 = vmul.f32 %v1331, %v1092
        %v1364 = vmul.f32 %v1332, %v1102
        %v1365 = vmul.f32 %v1333, %v1112
        %v1366 = vmul.f32 %v1334, %v1122
        %v1367 = vmul.f32 %v1335, %v1132
        %v1368 = vmul.f32 %v1336, %v1142
        %v1369 = vmul.f32 %v1337, %v1152
        %v1370 = vmul.f32 %v1338, %v1162
        %v1371 = vmul.f32 %v1339, %v1172
        %v1372 = vmul.f32 %v1340, %v1182
        %v1373 = vmul.f32 %v1341, %v1192
        %v1374 = vmul.f32 %v1342, %v1202
        %v1375 = vmul.f32 %v1343, %v1212
        %v1376 = vmul.f32 %v1344, %v1222
        %v1377 = vmul.f32 %v1345, %v1232
        %v1378 = vmul.f32 %v1346, %v1242
        %v1379 = vmul.f32 %v1347, %v1252
        %v1380 = vmul.f32 %v1348, %v1262
        %v1381 = vmul.f32 %v1349, %v1272
        %v1382 = vmul.f32 %v1350, %v1282
        %v1383 = vmul.f32 %v1351, %v1292
        %v1384 = vmul.f32 %v1352, %v1302
        %v1385 = vmul.f32 %v1353, %v1312
        %v1386 = vmul.f32 %v1354, %v1322
        %v1387 = vmul.f32 %v1355, %v1012
        %v1388 = vmul.f32 %v1356, %v1022
        %v1389 = vmul.f32 %v1357, %v1032
        %v1390 = vmul.f32 %v1358, %v1042
        %v1391 = vmul.f32 %v1359, %v1052
        %v1392 = vmul.f32 %v1360, %v1062
        %v1393 = vmul.f32 %v1361, %v1072
        %v1394 = vmul.f32 %v1362, %v1082
        %v1395 = vmul.f32 %v1363, %v1092
        %v1396 = vmul.f32 %v1364, %v1102
        %v1397 = vmul.f32 %v1365, %v1112
        %v1398 = vmul.f32 %v1366, %v1122
        %v1399 = vmul.f32 %v1367, %v1132
        %v1400 = vmul.f32 %v1368, %v1142
        %v1401 = vmul.f32 %v1369, %v1152
        %v1402 = vmul.f32 %v1370, %v1162
        %v1403 = vmul.f32 %v1371, %v1172
        %v1404 = vmul.f32 %v1372, %v1182
        %v1405 = vmul.f32 %v1373, %v1192
        %v1406 = vmul.f32 %v1374, %v1202
        %v1407 = vmul.f32 %v1375, %v1212
        %v1408 = vmul.f32 %v1376, %v1222
        %v1409 = vmul.f32 %v1377, %v1232
        %v1410 = vmul.f32 %v1378, %v1242
        %v1411 = vmul.f32 %v1379, %v1252
        %v1412 = vmul.f32 %v1380, %v1262
        %v1413 = vmul.f32 %v1381, %v1272
        %v1414 = vmul.f32 %v1382, %v1282
        %v1415 = vmul.f32 %v1383, %v1292
        %v1416 = vmul.f32 %v1384, %v1302
        %v1417 = vmul.f32 %v1385, %v1312
        %v1418 = vmul.f32 %v1386, %v1322
        %v1419 = vsub.f32 1.5, %v1387
        %v1420 = vsub.f32 1.5, %v1388
        %v1421 = vsub.f32 1.5, %v1389
        %v1422 = vsub.f32 1.5, %v1390
        %v1423 = vsub.f32 1.5, %v1391
        %v1424 = vsub.f32 1.5, %v1392
        %v1425 = vsub.f32 1.5, %v1393
        %v1426 = vsub.f32 1.5, %v1394
        %v1427 = vsub.f32 1.5, %v1395
        %v1428 = vsub.f32 1.5, %v1396
        %v1429 = vsub.f32 1.5, %v1397
        %v1430 = vsub.f32 1.5, %v1398
        %v1431 = vsub.f32 1.5, %v1399
        %v1432 = vsub.f32 1.5, %v1400
        %v1433 = vsub.f32 1.5, %v1401
        %v1434 = vsub.f32 1.5, %v1402
        %v1435 = vsub.f32 1.5, %v1403
        %v1436 = vsub.f32 1.5, %v1404
        %v1437 = vsub.f32 1.5, %v1405
        %v1438 = vsub.f32 1.5, %v1406
        %v1439 = vsub.f32 1.5, %v1407
        %v1440 = vsub.f32 1.5, %v1408
        %v1441 = vsub.f32 1.5, %v1409
        %v1442 = vsub.f32 1.5, %v1410
        %v1443 = vsub.f32 1.5, %v1411
        %v1444 = vsub.f32 1.5, %v1412
        %v1445 = vsub.f32 1.5, %v1413
        %v1446 = vsub.f32 1.5, %v1414
        %v1447 = vsub.f32 1.5, %v1415
        %v1448 = vsub.f32 1.5, %v1416
        %v1449 = vsub.f32 1.5, %v1417
        %v1450 = vsub.f32 1.5, %v1418
        %v1451 = vmul.f32 %v1012, %v1419
        %v1452 = vmul.f32 %v1022, %v1420
        %v1453 = vmul.f32 %v1032, %v1421
        %v1454 = vmul.f32 %v1042, %v1422
        %v1455 = vmul.f32 %v1052, %v1423
        %v1456 = vmul.f32 %v1062, %v1424
        %v1457 = vmul.f32 %v1072, %v1425
        %v1458 = vmul.f32 %v1082, %v1426
        %v1459 = vmul.f32 %v1092, %v1427
        %v1460 = vmul.f32 %v1102, %v1428
        %v1461 = vmul.f32 %v1112, %v1429
        %v1462 = vmul.f32 %v1122, %v1430
        %v1463 = vmul.f32 %v1132, %v1431
        %v1464 = vmul.f32 %v1142, %v1432
        %v1465 = vmul.f32 %v1152, %v1433
        %v1466 = vmul.f32 %v1162, %v1434
        %v1467 = vmul.f32 %v1172, %v1435
        %v1468 = vmul.f32 %v1182, %v1436
        %v1469 = vmul.f32 %v1192, %v1437
        %v1470 = vmul.f32 %v1202, %v1438
        %v1471 = vmul.f32 %v1212, %v1439
        %v1472 = vmul.f32 %v1222, %v1440
        %v1473 = vmul.f32 %v1232, %v1441
        %v1474 = vmul.f32 %v1242, %v1442
        %v1475 = vmul.f32 %v1252, %v1443
        %v1476 = vmul.f32 %v1262, %v1444
        %v1477 = vmul.f32 %v1272, %v1445
        %v1478 = vmul.f32 %v1282, %v1446
        %v1479 = vmul.f32 %v1292, %v1447
        %v1480 = vmul.f32 %v1302, %v1448
        %v1481 = vmul.f32 %v1312, %v1449
        %v1482 = vmul.f32 %v1322, %v1450
        %v1483 = vmul.f32 %v421, %v1451
        %v1484 = vmul.f32 %v424, %v1452
        %v1485 = vmul.f32 %v427, %v1453
        %v1486 = vmul.f32 %v430, %v1454
        %v1487 = vmul.f32 %v433, %v1455
        %v1488 = vmul.f32 %v436, %v1456
        %v1489 = vmul.f32 %v439, %v1457
        %v1490 = vmul.f32 %v442, %v1458
        %v1491 = vmul.f32 %v445, %v1459
        %v1492 = vmul.f32 %v448, %v1460
        %v1493 = vmul.f32 %v451, %v1461
        %v1494 = vmul.f32 %v454, %v1462
        %v1495 = vmul.f32 %v457, %v1463
        %v1496 = vmul.f32 %v460, %v1464
        %v1497 = vmul.f32 %v463, %v1465
        %v1498 = vmul.f32 %v466, %v1466
        %v1499 = vmul.f32 %v469, %v1467
        %v1500 = vmul.f32 %v472, %v1468
        %v1501 = vmul.f32 %v475, %v1469
        %v1502 = vmul.f32 %v478, %v1470
        %v1503 = vmul.f32 %v481, %v1471
        %v1504 = vmul.f32 %v484, %v1472
        %v1505 = vmul.f32 %v487, %v1473
        %v1506 = vmul.f32 %v490, %v1474
        %v1507 = vmul.f32 %v493, %v1475
        %v1508 = vmul.f32 %v496, %v1476
        %v1509 = vmul.f32 %v499, %v1477
        %v1510 = vmul.f32 %v502, %v1478
        %v1511 = vmul.f32 %v505, %v1479
        %v1512 = vmul.f32 %v508, %v1480
        %v1513 = vmul.f32 %v511, %v1481
        %v1514 = vmul.f32 %v514, %v1482
        %vm1515 = vcmp.gt.f32.partialorder %v580, 0.0
        %vm1516 = vcmp.gt.f32.partialorder %v581, 0.0
        %vm1517 = vcmp.gt.f32.partialorder %v582, 0.0
        %vm1518 = vcmp.gt.f32.partialorder %v583, 0.0
        %vm1519 = vcmp.gt.f32.partialorder %v584, 0.0
        %vm1520 = vcmp.gt.f32.partialorder %v585, 0.0
        %vm1521 = vcmp.gt.f32.partialorder %v586, 0.0
        %vm1522 = vcmp.gt.f32.partialorder %v587, 0.0
        %vm1523 = vcmp.gt.f32.partialorder %v588, 0.0
        %vm1524 = vcmp.gt.f32.partialorder %v589, 0.0
        %vm1525 = vcmp.gt.f32.partialorder %v590, 0.0
        %vm1526 = vcmp.gt.f32.partialorder %v591, 0.0
        %vm1527 = vcmp.gt.f32.partialorder %v592, 0.0
        %vm1528 = vcmp.gt.f32.partialorder %v593, 0.0
        %vm1529 = vcmp.gt.f32.partialorder %v594, 0.0
        %vm1530 = vcmp.gt.f32.partialorder %v595, 0.0
        %vm1531 = vcmp.gt.f32.partialorder %v596, 0.0
        %vm1532 = vcmp.gt.f32.partialorder %v597, 0.0
        %vm1533 = vcmp.gt.f32.partialorder %v598, 0.0
        %vm1534 = vcmp.gt.f32.partialorder %v599, 0.0
        %vm1535 = vcmp.gt.f32.partialorder %v600, 0.0
        %vm1536 = vcmp.gt.f32.partialorder %v601, 0.0
        %vm1537 = vcmp.gt.f32.partialorder %v602, 0.0
        %vm1538 = vcmp.gt.f32.partialorder %v603, 0.0
        %vm1539 = vcmp.gt.f32.partialorder %v604, 0.0
        %vm1540 = vcmp.gt.f32.partialorder %v605, 0.0
        %vm1541 = vcmp.gt.f32.partialorder %v606, 0.0
        %vm1542 = vcmp.gt.f32.partialorder %v607, 0.0
        %vm1543 = vcmp.gt.f32.partialorder %v608, 0.0
        %vm1544 = vcmp.gt.f32.partialorder %v609, 0.0
        %vm1545 = vcmp.gt.f32.partialorder %v610, 0.0
        %vm1546 = vcmp.gt.f32.partialorder %v611, 0.0
        %v1547 = vmul.f32 %v308, %v1451
        %v1548 = vmul.f32 %v311, %v1452
        %v1549 = vmul.f32 %v314, %v1453
        %v1550 = vmul.f32 %v317, %v1454
        %v1551 = vmul.f32 %v320, %v1455
        %v1552 = vmul.f32 %v323, %v1456
        %v1553 = vmul.f32 %v326, %v1457
        %v1554 = vmul.f32 %v329, %v1458
        %v1555 = vmul.f32 %v332, %v1459
        %v1556 = vmul.f32 %v335, %v1460
        %v1557 = vmul.f32 %v338, %v1461
        %v1558 = vmul.f32 %v341, %v1462
        %v1559 = vmul.f32 %v344, %v1463
        %v1560 = vmul.f32 %v347, %v1464
        %v1561 = vmul.f32 %v350, %v1465
        %v1562 = vmul.f32 %v353, %v1466
        %v1563 = vmul.f32 %v356, %v1467
        %v1564 = vmul.f32 %v359, %v1468
        %v1565 = vmul.f32 %v362, %v1469
        %v1566 = vmul.f32 %v365, %v1470
        %v1567 = vmul.f32 %v368, %v1471
        %v1568 = vmul.f32 %v371, %v1472
        %v1569 = vmul.f32 %v374, %v1473
        %v1570 = vmul.f32 %v377, %v1474
        %v1571 = vmul.f32 %v380, %v1475
        %v1572 = vmul.f32 %v383, %v1476
        %v1573 = vmul.f32 %v386, %v1477
        %v1574 = vmul.f32 %v389, %v1478
        %v1575 = vmul.f32 %v392, %v1479
        %v1576 = vmul.f32 %v395, %v1480
        %v1577 = vmul.f32 %v398, %v1481
        %v1578 = vmul.f32 %v401, %v1482
        %v1579 = vsel %vm1515, %v1547, 1.0
        %v1580 = vsel %vm1516, %v1548, 1.0
        %v1581 = vsel %vm1517, %v1549, 1.0
        %v1582 = vsel %vm1518, %v1550, 1.0
        %v1583 = vsel %vm1519, %v1551, 1.0
        %v1584 = vsel %vm1520, %v1552, 1.0
        %v1585 = vsel %vm1521, %v1553, 1.0
        %v1586 = vsel %vm1522, %v1554, 1.0
        %v1587 = vsel %vm1523, %v1555, 1.0
        %v1588 = vsel %vm1524, %v1556, 1.0
        %v1589 = vsel %vm1525, %v1557, 1.0
        %v1590 = vsel %vm1526, %v1558, 1.0
        %v1591 = vsel %vm1527, %v1559, 1.0
        %v1592 = vsel %vm1528, %v1560, 1.0
        %v1593 = vsel %vm1529, %v1561, 1.0
        %v1594 = vsel %vm1530, %v1562, 1.0
        %v1595 = vsel %vm1531, %v1563, 1.0
        %v1596 = vsel %vm1532, %v1564, 1.0
        %v1597 = vsel %vm1533, %v1565, 1.0
        %v1598 = vsel %vm1534, %v1566, 1.0
        %v1599 = vsel %vm1535, %v1567, 1.0
        %v1600 = vsel %vm1536, %v1568, 1.0
        %v1601 = vsel %vm1537, %v1569, 1.0
        %v1602 = vsel %vm1538, %v1570, 1.0
        %v1603 = vsel %vm1539, %v1571, 1.0
        %v1604 = vsel %vm1540, %v1572, 1.0
        %v1605 = vsel %vm1541, %v1573, 1.0
        %v1606 = vsel %vm1542, %v1574, 1.0
        %v1607 = vsel %vm1543, %v1575, 1.0
        %v1608 = vsel %vm1544, %v1576, 1.0
        %v1609 = vsel %vm1545, %v1577, 1.0
        %v1610 = vsel %vm1546, %v1578, 1.0
        %1611 = vst [vmem:[%s137] sm:$0xff] %v939
        %1612 = vst [vmem:[%s137 + $0x18] sm:$0xff] %v940
        %1613 = vst [vmem:[%s137 + $0x30] sm:$0xff] %v941
        %1614 = vst [vmem:[%s137 + $0x48] sm:$0xff] %v942
        %1615 = vst [vmem:[%s137 + $0x60] sm:$0xff] %v943
        %1616 = vst [vmem:[%s137 + $0x78] sm:$0xff] %v944
        %1617 = vst [vmem:[%s137 + $0x90] sm:$0xff] %v945
        %1618 = vst [vmem:[%s137 + $0xa8] sm:$0xff] %v946
        %1619 = vst [vmem:[%s137 + $0xc0] sm:$0xff] %v947
        %1620 = vst [vmem:[%s137 + $0xd8] sm:$0xff] %v948
        %1621 = vst [vmem:[%s137 + $0xf0] sm:$0xff] %v949
        %1622 = vst [vmem:[%s137 + $0x108] sm:$0xff] %v950
        %1623 = vst [vmem:[%s137 + $0x120] sm:$0xff] %v951
        %1624 = vst [vmem:[%s137 + $0x138] sm:$0xff] %v952
        %1625 = vst [vmem:[%s137 + $0x150] sm:$0xff] %v953
        %1626 = vst [vmem:[%s137 + $0x168] sm:$0xff] %v954
        %1627 = vst [vmem:[%s137 + $0x180] sm:$0xff] %v955
        %1628 = vst [vmem:[%s137 + $0x198] sm:$0xff] %v956
        %1629 = vst [vmem:[%s137 + $0x1b0] sm:$0xff] %v957
        %1630 = vst [vmem:[%s137 + $0x1c8] sm:$0xff] %v958
        %1631 = vst [vmem:[%s137 + $0x1e0] sm:$0xff] %v959
        %1632 = vst [vmem:[%s137 + $0x1f8] sm:$0xff] %v960
        %1633 = vst [vmem:[%s137 + $0x210] sm:$0xff] %v961
        %1634 = vst [vmem:[%s137 + $0x228] sm:$0xff] %v962
        %1635 = vst [vmem:[%s137 + $0x240] sm:$0xff] %v963
        %1636 = vst [vmem:[%s137 + $0x258] sm:$0xff] %v964
        %1637 = vst [vmem:[%s137 + $0x270] sm:$0xff] %v965
        %1638 = vst [vmem:[%s137 + $0x288] sm:$0xff] %v966
        %1639 = vst [vmem:[%s137 + $0x2a0] sm:$0xff] %v967
        %1640 = vst [vmem:[%s137 + $0x2b8] sm:$0xff] %v968
        %1641 = vst [vmem:[%s137 + $0x2d0] sm:$0xff] %v969
        %1642 = vst [vmem:[%s137 + $0x2e8] sm:$0xff] %v970
        %1643 = vst [vmem:[%s137 + $0x8] sm:$0xff] %v1483
        %1644 = vst [vmem:[%s137 + $0x20] sm:$0xff] %v1484
        %1645 = vst [vmem:[%s137 + $0x38] sm:$0xff] %v1485
        %1646 = vst [vmem:[%s137 + $0x50] sm:$0xff] %v1486
        %1647 = vst [vmem:[%s137 + $0x68] sm:$0xff] %v1487
        %1648 = vst [vmem:[%s137 + $0x80] sm:$0xff] %v1488
        %1649 = vst [vmem:[%s137 + $0x98] sm:$0xff] %v1489
        %1650 = vst [vmem:[%s137 + $0xb0] sm:$0xff] %v1490
        %1651 = vst [vmem:[%s137 + $0xc8] sm:$0xff] %v1491
        %1652 = vst [vmem:[%s137 + $0xe0] sm:$0xff] %v1492
        %1653 = vst [vmem:[%s137 + $0xf8] sm:$0xff] %v1493
        %1654 = vst [vmem:[%s137 + $0x110] sm:$0xff] %v1494
        %1655 = vst [vmem:[%s137 + $0x128] sm:$0xff] %v1495
        %1656 = vst [vmem:[%s137 + $0x140] sm:$0xff] %v1496
        %1657 = vst [vmem:[%s137 + $0x158] sm:$0xff] %v1497
        %1658 = vst [vmem:[%s137 + $0x170] sm:$0xff] %v1498
        %1659 = vst [vmem:[%s137 + $0x188] sm:$0xff] %v1499
        %1660 = vst [vmem:[%s137 + $0x1a0] sm:$0xff] %v1500
        %1661 = vst [vmem:[%s137 + $0x1b8] sm:$0xff] %v1501
        %1662 = vst [vmem:[%s137 + $0x1d0] sm:$0xff] %v1502
        %1663 = vst [vmem:[%s137 + $0x1e8] sm:$0xff] %v1503
        %1664 = vst [vmem:[%s137 + $0x200] sm:$0xff] %v1504
        %1665 = vst [vmem:[%s137 + $0x218] sm:$0xff] %v1505
        %1666 = vst [vmem:[%s137 + $0x230] sm:$0xff] %v1506
        %1667 = vst [vmem:[%s137 + $0x248] sm:$0xff] %v1507
        %1668 = vst [vmem:[%s137 + $0x260] sm:$0xff] %v1508
        %1669 = vst [vmem:[%s137 + $0x278] sm:$0xff] %v1509
        %1670 = vst [vmem:[%s137 + $0x290] sm:$0xff] %v1510
        %1671 = vst [vmem:[%s137 + $0x2a8] sm:$0xff] %v1511
        %1672 = vst [vmem:[%s137 + $0x2c0] sm:$0xff] %v1512
        %1673 = vst [vmem:[%s137 + $0x2d8] sm:$0xff] %v1513
        %1674 = vst [vmem:[%s137 + $0x2f0] sm:$0xff] %v1514
        %1675 = vst [vmem:[%s137 + $0x10] sm:$0xff] %v1579
        %1676 = vst [vmem:[%s137 + $0x28] sm:$0xff] %v1580
        %1677 = vst [vmem:[%s137 + $0x40] sm:$0xff] %v1581
        %1678 = vst [vmem:[%s137 + $0x58] sm:$0xff] %v1582
        %1679 = vst [vmem:[%s137 + $0x70] sm:$0xff] %v1583
        %1680 = vst [vmem:[%s137 + $0x88] sm:$0xff] %v1584
        %1681 = vst [vmem:[%s137 + $0xa0] sm:$0xff] %v1585
        %1682 = vst [vmem:[%s137 + $0xb8] sm:$0xff] %v1586
        %1683 = vst [vmem:[%s137 + $0xd0] sm:$0xff] %v1587
        %1684 = vst [vmem:[%s137 + $0xe8] sm:$0xff] %v1588
        %1685 = vst [vmem:[%s137 + $0x100] sm:$0xff] %v1589
        %1686 = vst [vmem:[%s137 + $0x118] sm:$0xff] %v1590
        %1687 = vst [vmem:[%s137 + $0x130] sm:$0xff] %v1591
        %1688 = vst [vmem:[%s137 + $0x148] sm:$0xff] %v1592
        %1689 = vst [vmem:[%s137 + $0x160] sm:$0xff] %v1593
        %1690 = vst [vmem:[%s137 + $0x178] sm:$0xff] %v1594
        %1691 = vst [vmem:[%s137 + $0x190] sm:$0xff] %v1595
        %1692 = vst [vmem:[%s137 + $0x1a8] sm:$0xff] %v1596
        %1693 = vst [vmem:[%s137 + $0x1c0] sm:$0xff] %v1597
        %1694 = vst [vmem:[%s137 + $0x1d8] sm:$0xff] %v1598
        %1695 = vst [vmem:[%s137 + $0x1f0] sm:$0xff] %v1599
        %1696 = vst [vmem:[%s137 + $0x208] sm:$0xff] %v1600
        %1697 = vst [vmem:[%s137 + $0x220] sm:$0xff] %v1601
        %1698 = vst [vmem:[%s137 + $0x238] sm:$0xff] %v1602
        %1699 = vst [vmem:[%s137 + $0x250] sm:$0xff] %v1603
        %1700 = vst [vmem:[%s137 + $0x268] sm:$0xff] %v1604
        %1701 = vst [vmem:[%s137 + $0x280] sm:$0xff] %v1605
        %1702 = vst [vmem:[%s137 + $0x298] sm:$0xff] %v1606
        %1703 = vst [vmem:[%s137 + $0x2b0] sm:$0xff] %v1607
        %1704 = vst [vmem:[%s137 + $0x2c8] sm:$0xff] %v1608
        %1705 = vst [vmem:[%s137 + $0x2e0] sm:$0xff] %v1609
        %1706 = vst [vmem:[%s137 + $0x2f8] sm:$0xff] %v1610
        %s1707 = sand.u32 %s71, 1
        %s1708 = scalar_lea.sflag [#allocation3], %s1707
        %s1709 = sand.u32 %s71, 1
        %s1710 = smul.addr %s1709, 768
        %s1711 = scalar_lea.vmem [#allocation2], %s1710
        // Predicated region
        $region29: #{tpu_custom_call.1} parent=27 // pred_check
          %p1712 = pneg %p81
        $region30: #{tpu_custom_call.1} parent=27 // pred_check_branch
          %1714 = sbr.rel (%p1712) target = $region32
        $region31: #{tpu_custom_call.1} parent=27 // pred_region
          %s1715 = smul.u32 32, %s16
          %1717 = vsyncadd %s1708, 0
          %s1718 = smul.addr %s1715, 3
          %s1719 = smul.addr %s1718, 8
          %s1720 = scalar_lea.hbm %s2, %s1719
          %s1721 = sshll.u32 %s1711, 4
          %s1722 = int_to_ptr.vmem [resolvable:$true] %s1721
          %s1723 = sshll.u32 %s1720, 4
          %s1724 = int_to_ptr.hbm [resolvable:$true] %s1723
          %1729 = dma.vmem_to_hbm [thread:$0]  %s1722, 12288, %s1724, %s1708, 384, 384, 24
        $region32: #{tpu_custom_call.1} parent=27 // pred_fallthru
          _
      $region28: #{tpu_custom_call.1} parent=5 // pred_fallthru
        _
      %p1730 = scmp.le.s32.totalorder 2, %s11
      // Predicated region
      $region33: #{tpu_custom_call.1} parent=5 // pred_check
        %p1731 = pneg %p1730
      $region34: #{tpu_custom_call.1} parent=5 // pred_check_branch
        %1733 = sbr.rel (%p1731) target = $region36
      $region35: #{tpu_custom_call.1} parent=5 // pred_region
        %s1734 = ssub.s32 %s11, 2
        // Predicated region
        $region37: #{tpu_custom_call.1} parent=35 // pred_check
          %p1735 = pneg %p87
        $region38: #{tpu_custom_call.1} parent=35 // pred_check_branch
          %1737 = sbr.rel (%p1735) target = $region40
        $region39: #{tpu_custom_call.1} parent=35 // pred_region
          %s1738 = sand.u32 %s72, 1
          %s1739 = scalar_lea.sflag [#allocation3], %s1738
          %s1740 = sand.u32 %s72, 1
          %s1741 = smul.addr %s1740, 768
          %s1742 = scalar_lea.vmem [#allocation2], %s1741
          %1744 = dma.done %s1739, 12288
        $region40: #{tpu_custom_call.1} parent=35 // pred_fallthru
          _
      $region36: #{tpu_custom_call.1} parent=5 // pred_fallthru
        _
    $region6: #{tpu_custom_call.1} parent=1 // loop_footer
      %s15 = sadd.s32 1, %s11
    $region7: #{tpu_custom_call.1} parent=1 // loop_footer_branch
      %10 = sbr.rel target = $region3
    $region8: #{tpu_custom_call.1} parent=1 // loop_exit
      _
    %1745 = vsyncpa [#allocation3], 1
    %s1746 = scalar_lea.sflag [#allocation3], 1
    %1747 = vsyncpa %s1746, 1

</llo_original>
